<compile_context>
chip_gen: v7x
topology: tpu7x:2x2x1
jax: 0.10.0
libtpu: 0.0.40
codegen_flags: <defaults>
</compile_context>

<pallas_src>
import functools
import math

import numpy as np
import jax
import jax.numpy as jnp
from jax.experimental import pallas as pl
from jax.experimental.pallas import tpu as pltpu


KERNEL_PARAM_ORDER = (
    "ln_g", "ln_b", "w_up", "b_up", "w_conv", "b_conv",
    "w_cproj", "b_cproj", "w_tproj", "b_tproj",
    "w_down", "b_down", "w_last", "b_last", "gn_g", "gn_b",
)


def _cdiv(a, b):
    return -(-a // b)


def _round_up(x, m):
    return _cdiv(x, m) * m


def _choose_batch_tile(B, block_b):
    """Pick (batch tile, padded batch) — lane-dense, >=2 grid steps on v7x."""
    B128 = _round_up(max(B, 1), 128)
    # v7x has 2 TensorCores: make sure the batch grid has >= 2 steps whenever
    # there is enough work so the "parallel" axis actually splits.
    min_tiles = 2 if B128 >= 256 else 1
    Bt = max(128, min(block_b, _round_up(_cdiv(B128, min_tiles), 128)))
    Bp = _round_up(B128, Bt)
    return Bt, Bp


def _mlstm_kernel(
    x_ref, c_ref, n_ref, m_ref,
    ln_g, ln_b, w_up, b_up, w_conv, b_conv,
    w_cproj, b_cproj, w_tproj, b_tproj,
    w_down, b_down, w_last, b_last, gn_g, gn_b,
    out_ref, c_out_ref, n_out_ref, m_out_ref,
    h_scr,
    *, head_num, head_dim, p_dim,
):
    """mLSTM cell on a feature-major (features, Bt) batch tile."""
    H, D = head_num, head_dim
    hid = H * D
    f32, bf16 = jnp.float32, jnp.bfloat16

    def mm(w_ref_, x):
        # Weights are pre-cast to bf16 at pack time; only the activation is
        # cast here.  Single-pass bf16 MXU matmul with f32 accumulation.
        return jnp.dot(w_ref_[...], x.astype(bf16), preferred_element_type=f32)

    seq = x_ref[...]                                        # (I, Bt)

    # --- inp_norm: LayerNorm over the feature (sublane) axis ---
    mu = jnp.mean(seq, axis=0, keepdims=True)
    var = jnp.mean((seq - mu) ** 2, axis=0, keepdims=True)
    x_n = (seq - mu) * jax.lax.rsqrt(var + 1e-5) * ln_g[...] + ln_b[...]

    # --- fused up_l / up_r projections ---
    up = mm(w_up, x_n) + b_up[...]                          # (P+hid, Bt)
    x_t = up[:p_dim, :]                                     # (P, Bt)
    r_t = up[p_dim:, :]                                     # (hid, Bt)

    # --- causal conv (banded matmul over the feature axis) + SiLU ---
    # TODO(synk): could be ker_size pltpu.roll + FMA, but with a large batch
    # tile the chained-matmul latency is hidden, so the banded matmul stays.
    x_c = mm(w_conv, x_t) + b_conv[...]                     # (P, Bt)
    x_c = x_c * jax.nn.sigmoid(x_c)

    # --- fused W_q / W_k / skip / W_i / W_f from x_c ---
    cp = mm(w_cproj, x_c) + b_cproj[...]                    # (3*hid+2*H, Bt)
    q = cp[0:hid, :]
    k = cp[hid:2 * hid, :] * (1.0 / math.sqrt(D))
    skip = cp[2 * hid:3 * hid, :]
    i_t = cp[3 * hid:3 * hid + H, :]                        # (H, Bt)
    f_t = cp[3 * hid + H:3 * hid + 2 * H, :]                # (H, Bt)

    # --- fused W_v / W_o from x_t ---
    tp = mm(w_tproj, x_t) + b_tproj[...]                    # (2*hid, Bt)
    v = tp[0:hid, :]
    o_sig = jax.nn.sigmoid(tp[hid:2 * hid, :])

    # --- exponential gating with max-stabilizer (VPU/EUP) ---
    m_tm1 = m_ref[...]                                      # (H, Bt)
    m_t = jnp.maximum(f_t + m_tm1, i_t)
    i_e = jnp.exp(i_t - m_t)
    f_e = jnp.exp(f_t - m_t + m_tm1)
    m_out_ref[...] = m_t

    gn_g_all = gn_g[...]
    gn_b_all = gn_b[...]

    # --- per-head covariance update & readout ---
    # No jnp.concatenate anywhere: per-head c/n blocks go straight into the
    # output refs, the per-row readout goes into the (hid, Bt) VMEM scratch.
    for h in range(H):
        i_h = i_e[h:h + 1, :]                               # (1, Bt)
        f_h = f_e[h:h + 1, :]                               # (1, Bt)
        q_h = q[h * D:(h + 1) * D, :]                       # (D, Bt)
        k_h = k[h * D:(h + 1) * D, :]                       # (D, Bt)
        v_h = v[h * D:(h + 1) * D, :]                       # (D, Bt)

        n_h = f_h * n_ref[h * D:(h + 1) * D, :] + i_h * k_h
        n_out_ref[h * D:(h + 1) * D, :] = n_h
        den_h = jnp.maximum(jnp.sum(n_h * q_h, axis=0, keepdims=True), 1.0)
        inv_den = pl.reciprocal(den_h, approx=True)         # (1, Bt), EUP

        for d in range(D):
            r0 = h * D * D + d * D
            # Row block d of the v (x) k outer product fused into the update;
            # stored directly, never stacked.
            c_d = f_h * c_ref[r0:r0 + D, :] + (i_h * v_h[d:d + 1, :]) * k_h
            c_out_ref[r0:r0 + D, :] = c_d                   # (D, Bt)
            num_d = jnp.sum(c_d * q_h, axis=0, keepdims=True)
            h_scr[h * D + d:h * D + d + 1, :] = (
                o_sig[h * D + d:h * D + d + 1, :] * num_d * inv_den)

        # GroupNorm over this head's D channels + affine + skip, in place.
        hh = h_scr[h * D:(h + 1) * D, :]
        gm = jnp.mean(hh, axis=0, keepdims=True)
        cent = hh - gm
        gv = jnp.mean(cent * cent, axis=0, keepdims=True)
        h_scr[h * D:(h + 1) * D, :] = (
            cent * jax.lax.rsqrt(gv + 1e-5)
            * gn_g_all[h * D:(h + 1) * D, :]
            + gn_b_all[h * D:(h + 1) * D, :]
            + skip[h * D:(h + 1) * D, :])

    # --- gated output, down & last projections ---
    out = h_scr[...] * (r_t * jax.nn.sigmoid(r_t))          # (hid, Bt)
    out = mm(w_down, out) + b_down[...]                     # (I, Bt)
    out_ref[...] = mm(w_last, out + x_n) + b_last[...]      # (O, Bt)


def _mlstm_forward_fm(aggr_fm, c_in, n_in, m_in, packed, *,
                      head_num, head_dim, Bt):
    """Run the mLSTM cell on feature-major inputs of padded batch width Bp."""
    I, Bp = aggr_fm.shape
    H, D = head_num, head_dim
    hid, HDD = H * D, H * D * D
    P = packed[KERNEL_PARAM_ORDER.index("w_conv")].shape[0]
    O = packed[KERNEL_PARAM_ORDER.index("w_last")].shape[0]

    def bspec(rows):
        return pl.BlockSpec((rows, Bt), lambda i: (0, i))

    def wspec(arr):
        # Full-array block + constant index_map: weights stay VMEM resident.
        # pipeline_mode=pl.Buffered(1) would drop the duplicate double-buffer
        # copy, but the bf16 packed weights total < 20 KiB, so it is not worth
        # depending on single-buffer pipelining here.
        return pl.BlockSpec(arr.shape, lambda i: (0, 0))

    kernel = functools.partial(_mlstm_kernel, head_num=H, head_dim=D, p_dim=P)

    # Per-step VMEM footprint at Bt=2048 with these feature sizes is ~4 MiB
    # (double-buffered I/O + temporaries), far below the 32 MiB scoped default
    # on v5e/v6e/v7x, so no vmem_limit_bytes override is needed.
    return pl.pallas_call(
        kernel,
        out_shape=(
            jax.ShapeDtypeStruct((O, Bp), jnp.float32),
            jax.ShapeDtypeStruct((HDD, Bp), jnp.float32),
            jax.ShapeDtypeStruct((hid, Bp), jnp.float32),
            jax.ShapeDtypeStruct((H, Bp), jnp.float32),
        ),
        grid=(Bp // Bt,),
        in_specs=[bspec(I), bspec(HDD), bspec(hid), bspec(H)]
                 + [wspec(w) for w in packed],
        out_specs=(bspec(O), bspec(HDD), bspec(hid), bspec(H)),
        scratch_shapes=[pltpu.VMEM((hid, Bt), jnp.float32)],
        compiler_params=pltpu.CompilerParams(
            dimension_semantics=("parallel",)),
    )(aggr_fm, c_in, n_in, m_in, *packed)


@functools.partial(jax.jit,
                   static_argnames=("head_num", "head_dim", "block_b"),
                   donate_argnums=(0, 1, 2, 3))
def _tgn_mlstm_step(memory_fm, c_fm, n_fm, m_fm, n_id, aggr, packed, *,
                    head_num, head_dim, block_b):
    """Gather -> mLSTM Pallas kernel -> scatter, fused under one jit.

    The state buffers are donated so the column scatter updates them in place
    (O(B) HBM traffic) instead of copying the full (feat, num_nodes) arrays.
    Padded batch lanes use the out-of-range sink index `num_nodes`: clipped
    for the gather, dropped by the scatter, so they never corrupt real state.
    """
    num_nodes = memory_fm.shape[1]
    B = aggr.shape[0]
    Bt, Bp = _choose_batch_tile(B, block_b)

    ids_pad = jnp.concatenate(
        [n_id.astype(jnp.int32),
         jnp.full((Bp - B,), num_nodes, jnp.int32)])
    gather_ids = jnp.minimum(ids_pad, num_nodes - 1)

    c_in = jnp.take(c_fm, gather_ids, axis=1)               # (HDD, Bp)
    n_in = jnp.take(n_fm, gather_ids, axis=1)               # (HD, Bp)
    m_in = jnp.take(m_fm, gather_ids, axis=1)               # (H, Bp)
    aggr_fm = jnp.pad(aggr, ((0, Bp - B), (0, 0))).T        # (I, Bp)

    out_fm, c_out, n_out, m_out = _mlstm_forward_fm(
        aggr_fm, c_in, n_in, m_in, packed,
        head_num=head_num, head_dim=head_dim, Bt=Bt)

    memory_fm = memory_fm.at[:, ids_pad].set(out_fm, mode="drop")
    c_fm = c_fm.at[:, ids_pad].set(c_out, mode="drop")
    n_fm = n_fm.at[:, ids_pad].set(n_out, mode="drop")
    m_fm = m_fm.at[:, ids_pad].set(m_out, mode="drop")

    mem_ret = out_fm[:, :B].T                               # (B, memory_dim)
    return memory_fm, c_fm, n_fm, m_fm, mem_ret


def init_mlstm_params(key, inp_dim, oup_dim, head_num, head_dim,
                      p_factor=2, ker_size=4):
    """Parameters in the original (PyTorch-like) orientation."""
    H, D = head_num, head_dim
    hid = H * D
    P = int(p_factor * inp_dim)
    ks = jax.random.split(key, 24)

    def w(k, shape, scale=0.1):
        return jax.random.normal(k, shape, jnp.float32) * scale

    p = {}
    p["ln_g"] = jnp.ones((1, inp_dim), jnp.float32)
    p["ln_b"] = jnp.zeros((1, inp_dim), jnp.float32)
    p["w_upl"], p["b_upl"] = w(ks[0], (inp_dim, P)), w(ks[1], (1, P), 0.02)
    p["w_upr"], p["b_upr"] = w(ks[2], (inp_dim, hid)), w(ks[3], (1, hid), 0.02)

    # CausalConv1d(1, 1, kernel_size=4) lowered to a banded (P, P) matrix.
    conv_w = w(ks[4], (ker_size,), 0.3)
    M = jnp.zeros((P, P), jnp.float32)
    for kk in range(ker_size):
        M = M + conv_w[kk] * jnp.eye(P, k=(ker_size - 1 - kk), dtype=jnp.float32)
    p["conv_m"] = M
    p["conv_b"] = jnp.full((1, P), 0.05, jnp.float32)

    p["w_q"], p["b_q"] = w(ks[5], (P, hid)), w(ks[6], (1, hid), 0.02)
    p["w_k"], p["b_k"] = w(ks[7], (P, hid)), w(ks[8], (1, hid), 0.02)
    p["w_v"], p["b_v"] = w(ks[9], (P, hid)), w(ks[10], (1, hid), 0.02)
    p["w_i"], p["b_i"] = w(ks[11], (P, H)), w(ks[12], (1, H), 0.02)
    p["w_f"], p["b_f"] = w(ks[13], (P, H)), w(ks[14], (1, H), 0.02)
    p["w_o"], p["b_o"] = w(ks[15], (P, hid)), w(ks[16], (1, hid), 0.02)
    p["w_skip"] = w(ks[17], (P, hid))
    p["gn_g"] = jnp.ones((1, hid), jnp.float32)
    p["gn_b"] = jnp.zeros((1, hid), jnp.float32)
    p["w_down"], p["b_down"] = w(ks[18], (hid, inp_dim)), w(ks[19], (1, inp_dim), 0.02)
    p["w_last"], p["b_last"] = w(ks[20], (inp_dim, oup_dim)), w(ks[21], (1, oup_dim), 0.02)
    return p


def pack_kernel_params(p):
    """Transpose to feature-major (out, in), fuse projections, pre-cast to bf16."""
    hid = p["gn_g"].shape[1]
    bf16 = jnp.bfloat16
    pk = {}
    pk["ln_g"], pk["ln_b"] = p["ln_g"].T, p["ln_b"].T
    pk["w_up"] = jnp.concatenate([p["w_upl"], p["w_upr"]], axis=1).T.astype(bf16)
    pk["b_up"] = jnp.concatenate([p["b_upl"], p["b_upr"]], axis=1).T
    pk["w_conv"], pk["b_conv"] = p["conv_m"].T.astype(bf16), p["conv_b"].T
    pk["w_cproj"] = jnp.concatenate(
        [p["w_q"], p["w_k"], p["w_skip"], p["w_i"], p["w_f"]],
        axis=1).T.astype(bf16)
    pk["b_cproj"] = jnp.concatenate(
        [p["b_q"], p["b_k"], jnp.zeros((1, hid), jnp.float32),
         p["b_i"], p["b_f"]], axis=1).T
    pk["w_tproj"] = jnp.concatenate([p["w_v"], p["w_o"]], axis=1).T.astype(bf16)
    pk["b_tproj"] = jnp.concatenate([p["b_v"], p["b_o"]], axis=1).T
    pk["w_down"], pk["b_down"] = p["w_down"].T.astype(bf16), p["b_down"].T
    pk["w_last"], pk["b_last"] = p["w_last"].T.astype(bf16), p["b_last"].T
    pk["gn_g"], pk["gn_b"] = p["gn_g"].T, p["gn_b"].T
    return tuple(pk[k] for k in KERNEL_PARAM_ORDER)


class TGNMemoryPallas:
    """TGN memory with mLSTM memory updater; the mLSTM cell runs in Pallas.

    State buffers (memory / c / n / m) are stored feature-major
    (features, num_nodes) so the hot path never transposes state tensors; the
    whole gather -> kernel -> scatter update runs in one jitted,
    buffer-donating step so writeback is in-place and O(B), not O(num_nodes).
    """

    def __init__(self, num_nodes, raw_msg_dim, memory_dim, time_dim,
                 msg_out_channels, head_num=2, head_dim=4, key=None,
                 block_b=2048):
        self.num_nodes = num_nodes
        self.raw_msg_dim = raw_msg_dim
        self.memory_dim = memory_dim
        self.time_dim = time_dim
        self.head_num = head_num
        self.head_dim = head_dim
        self.inp_dim = msg_out_channels
        self.block_b = block_b
        self.params = init_mlstm_params(
            key if key is not None else jax.random.PRNGKey(0),
            msg_out_channels, memory_dim, head_num, head_dim)
        self.kernel_params = pack_kernel_params(self.params)
        self.reset_state()

    def reset_state(self):
        """reset_state semantics: zeros everywhere, n_state = ones."""
        H, D, N = self.head_num, self.head_dim, self.num_nodes
        self.memory = jnp.zeros((self.memory_dim, N), jnp.float32)
        self.hidden_state = jnp.zeros((H * D * D, N), jnp.float32)
        self.n_state = jnp.ones((H * D, N), jnp.float32)
        self.m_state = jnp.zeros((H, N), jnp.float32)
        self.last_update = jnp.zeros((N,), jnp.int32)

    def forward(self, n_id, aggr):
        # TODO(synk): message-store dicts (_update_msg_store/_compute_msg), the
        # message_module / aggregator_module callables, TimeEncoderMixer and
        # the scatter-max of last_update are host-side, dict-based,
        # data-dependent logic with no clean Pallas equivalent; `aggr` is the
        # already-aggregated per-node message tensor feeding the updater.
        (self.memory, self.hidden_state, self.n_state, self.m_state,
         mem) = _tgn_mlstm_step(
            self.memory, self.hidden_state, self.n_state, self.m_state,
            n_id, aggr, self.kernel_params,
            head_num=self.head_num, head_dim=self.head_dim,
            block_b=self.block_b)
        return mem, self.last_update[n_id]


def mlstm_reference(aggr, c_tm1, n_tm1, m_tm1, p, head_num, head_dim):
    """Pure-JAX reference with the exact PyTorch mLSTM.forward semantics.

    Matmul operands are cast to bf16 (f32 accumulation) to match the kernel's
    single-pass MXU numerics; everything else is f32.
    """
    H, D = head_num, head_dim
    B = aggr.shape[0]

    def mm(a, b):
        return jnp.dot(a.astype(jnp.bfloat16), b.astype(jnp.bfloat16),
                       preferred_element_type=jnp.float32)

    mu = aggr.mean(-1, keepdims=True)
    var = ((aggr - mu) ** 2).mean(-1, keepdims=True)
    x_n = (aggr - mu) * jax.lax.rsqrt(var + 1e-5) * p["ln_g"] + p["ln_b"]
    x_t = mm(x_n, p["w_upl"]) + p["b_upl"]
    r_t = mm(x_n, p["w_upr"]) + p["b_upr"]
    x_c = mm(x_t, p["conv_m"]) + p["conv_b"]
    x_c = x_c * jax.nn.sigmoid(x_c)
    q = (mm(x_c, p["w_q"]) + p["b_q"]).reshape(B, H, D)
    k = ((mm(x_c, p["w_k"]) + p["b_k"]) / math.sqrt(D)).reshape(B, H, D)
    v = (mm(x_t, p["w_v"]) + p["b_v"]).reshape(B, H, D)
    i_t = mm(x_c, p["w_i"]) + p["b_i"]
    f_t = mm(x_c, p["w_f"]) + p["b_f"]
    o_t = jax.nn.sigmoid(mm(x_t, p["w_o"]) + p["b_o"])
    m_t = jnp.maximum(f_t + m_tm1, i_t)
    i_e = jnp.exp(i_t - m_t)
    f_e = jnp.exp(f_t - m_t + m_tm1)
    c_t = (f_e[:, :, None, None] * c_tm1
           + i_e[:, :, None, None] * jnp.einsum("bhd,bhp->bhdp", v, k))
    n_t = f_e[:, :, None] * n_tm1 + i_e[:, :, None] * k
    num = jnp.einsum("bhdp,bhp->bhd", c_t, q)
    den = jnp.maximum(jnp.einsum("bhd,bhd->bh", n_t, q), 1.0)[:, :, None]
    h_t = o_t * (num / den).reshape(B, H * D)
    hg = h_t.reshape(B, H, D)
    gm = hg.mean(-1, keepdims=True)
    gv = ((hg - gm) ** 2).mean(-1, keepdims=True)
    h_norm = ((hg - gm) * jax.lax.rsqrt(gv + 1e-5)).reshape(B, H * D) * p["gn_g"] + p["gn_b"]
    out = (h_norm + mm(x_c, p["w_skip"])) * (r_t * jax.nn.sigmoid(r_t))
    out = mm(out, p["w_down"]) + p["b_down"]
    out = mm(out + x_n, p["w_last"]) + p["b_last"]
    return out, (c_t, n_t, m_t)


if __name__ == "__main__":
    key = jax.random.PRNGKey(0)
    k_param, k_aggr = jax.random.split(key, 2)

    num_nodes, raw_msg_dim, memory_dim, time_dim = 16, 8, 32, 8
    head_num, head_dim = 2, 4
    msg_out_channels = 16          # message_module.out_channels (mLSTM inp_dim)

    tgn = TGNMemoryPallas(num_nodes, raw_msg_dim, memory_dim, time_dim,
                          msg_out_channels, head_num=head_num,
                          head_dim=head_dim, key=k_param)

    n_id = jnp.array([0, 2, 3, 5, 7, 8, 11, 13], dtype=jnp.int32)
    B = n_id.shape[0]
    aggr = jax.random.normal(k_aggr, (B, msg_out_channels), jnp.float32)

    # Gathered initial states (pre-update) for the reference check.  These are
    # fresh arrays, so they survive donation of the state buffers in forward().
    c0 = tgn.hidden_state[:, n_id].T.reshape(B, head_num, head_dim, head_dim)
    n0 = tgn.n_state[:, n_id].T.reshape(B, head_num, head_dim)
    m0 = tgn.m_state[:, n_id].T

    memory_out, last_upd = tgn.forward(n_id, aggr)
    jax.block_until_ready(memory_out)

    ref_out, (ref_c, ref_n, ref_m) = mlstm_reference(
        aggr, c0, n0, m0, tgn.params, head_num, head_dim)
    ref_out = jax.block_until_ready(ref_out)

    c1 = tgn.hidden_state[:, n_id].T.reshape(B, head_num, head_dim, head_dim)
    n1 = tgn.n_state[:, n_id].T.reshape(B, head_num, head_dim)
    m1 = tgn.m_state[:, n_id].T
    mem_buf = tgn.memory[:, n_id].T

    # Tolerance reflects the shared bf16-operand / f32-accumulate matmul
    # numerics plus the approx-reciprocal readout normalization.
    tol = dict(rtol=5e-3, atol=5e-3)
    np.testing.assert_allclose(np.asarray(memory_out), np.asarray(ref_out), **tol)
    np.testing.assert_allclose(np.asarray(mem_buf), np.asarray(ref_out), **tol)
    np.testing.assert_allclose(np.asarray(c1), np.asarray(ref_c), **tol)
    np.testing.assert_allclose(np.asarray(n1), np.asarray(ref_n), **tol)
    np.testing.assert_allclose(np.asarray(m1), np.asarray(ref_m), **tol)

    print("KERNEL_OK")
</pallas_src>

<mosaic_0001>
module attributes {stable_mosaic.version = 11 : i64} {
  func.func @_mlstm_kernel(%arg0: i32, %arg1: memref<16x128xf32, #tpu.memory_space<vmem>>, %arg2: memref<32x128xf32, #tpu.memory_space<vmem>>, %arg3: memref<8x128xf32, #tpu.memory_space<vmem>>, %arg4: memref<2x128xf32, #tpu.memory_space<vmem>>, %arg5: memref<16x1xf32, #tpu.memory_space<vmem>>, %arg6: memref<16x1xf32, #tpu.memory_space<vmem>>, %arg7: memref<40x16xbf16, #tpu.memory_space<vmem>>, %arg8: memref<40x1xf32, #tpu.memory_space<vmem>>, %arg9: memref<32x32xbf16, #tpu.memory_space<vmem>>, %arg10: memref<32x1xf32, #tpu.memory_space<vmem>>, %arg11: memref<28x32xbf16, #tpu.memory_space<vmem>>, %arg12: memref<28x1xf32, #tpu.memory_space<vmem>>, %arg13: memref<16x32xbf16, #tpu.memory_space<vmem>>, %arg14: memref<16x1xf32, #tpu.memory_space<vmem>>, %arg15: memref<16x8xbf16, #tpu.memory_space<vmem>>, %arg16: memref<16x1xf32, #tpu.memory_space<vmem>>, %arg17: memref<32x16xbf16, #tpu.memory_space<vmem>>, %arg18: memref<32x1xf32, #tpu.memory_space<vmem>>, %arg19: memref<8x1xf32, #tpu.memory_space<vmem>>, %arg20: memref<8x1xf32, #tpu.memory_space<vmem>>, %arg21: memref<32x128xf32, #tpu.memory_space<vmem>>, %arg22: memref<32x128xf32, #tpu.memory_space<vmem>>, %arg23: memref<8x128xf32, #tpu.memory_space<vmem>>, %arg24: memref<2x128xf32, #tpu.memory_space<vmem>>, %arg25: memref<8x128xf32, #tpu.memory_space<vmem>>) attributes {dimension_semantics = [#tpu.dimension_semantics<parallel>], iteration_bounds = array<i64: 1>, scalar_prefetch = 0 : i64, scratch_operands = 1 : i64, tpu.core_type = #tpu.core_type<tc>, window_params = [{transform_indices = @transform_0, window_bounds = array<i64: 16, 128>}, {transform_indices = @transform_1, window_bounds = array<i64: 32, 128>}, {transform_indices = @transform_2, window_bounds = array<i64: 8, 128>}, {transform_indices = @transform_3, window_bounds = array<i64: 2, 128>}, {pipeline_mode = #tpu.pipeline_mode<synchronous>, transform_indices = @transform_4, window_bounds = array<i64: 16, 1>}, {pipeline_mode = #tpu.pipeline_mode<synchronous>, transform_indices = @transform_5, window_bounds = array<i64: 16, 1>}, {pipeline_mode = #tpu.pipeline_mode<synchronous>, transform_indices = @transform_6, window_bounds = array<i64: 40, 16>}, {pipeline_mode = #tpu.pipeline_mode<synchronous>, transform_indices = @transform_7, window_bounds = array<i64: 40, 1>}, {pipeline_mode = #tpu.pipeline_mode<synchronous>, transform_indices = @transform_8, window_bounds = array<i64: 32, 32>}, {pipeline_mode = #tpu.pipeline_mode<synchronous>, transform_indices = @transform_9, window_bounds = array<i64: 32, 1>}, {pipeline_mode = #tpu.pipeline_mode<synchronous>, transform_indices = @transform_10, window_bounds = array<i64: 28, 32>}, {pipeline_mode = #tpu.pipeline_mode<synchronous>, transform_indices = @transform_11, window_bounds = array<i64: 28, 1>}, {pipeline_mode = #tpu.pipeline_mode<synchronous>, transform_indices = @transform_12, window_bounds = array<i64: 16, 32>}, {pipeline_mode = #tpu.pipeline_mode<synchronous>, transform_indices = @transform_13, window_bounds = array<i64: 16, 1>}, {pipeline_mode = #tpu.pipeline_mode<synchronous>, transform_indices = @transform_14, window_bounds = array<i64: 16, 8>}, {pipeline_mode = #tpu.pipeline_mode<synchronous>, transform_indices = @transform_15, window_bounds = array<i64: 16, 1>}, {pipeline_mode = #tpu.pipeline_mode<synchronous>, transform_indices = @transform_16, window_bounds = array<i64: 32, 16>}, {pipeline_mode = #tpu.pipeline_mode<synchronous>, transform_indices = @transform_17, window_bounds = array<i64: 32, 1>}, {pipeline_mode = #tpu.pipeline_mode<synchronous>, transform_indices = @transform_18, window_bounds = array<i64: 8, 1>}, {pipeline_mode = #tpu.pipeline_mode<synchronous>, transform_indices = @transform_19, window_bounds = array<i64: 8, 1>}, {transform_indices = @transform_20, window_bounds = array<i64: 32, 128>}, {transform_indices = @transform_21, window_bounds = array<i64: 32, 128>}, {transform_indices = @transform_22, window_bounds = array<i64: 8, 128>}, {transform_indices = @transform_23, window_bounds = array<i64: 2, 128>}]} {
    %c0 = arith.constant 0 : index
    %c0_0 = arith.constant 0 : index
    %0 = vector.load %arg1[%c0, %c0_0] : memref<16x128xf32, #tpu.memory_space<vmem>>, vector<16x128xf32>
    %cst = arith.constant dense<0.000000e+00> : vector<128xf32>
    %1 = vector.multi_reduction <add>, %0, %cst [0] : vector<16x128xf32> to vector<128xf32>
    %2 = vector.shape_cast %1 : vector<128xf32> to vector<1x128xf32>
    %cst_1 = arith.constant 1.600000e+01 : f32
    %3 = vector.broadcast %cst_1 : f32 to vector<1x128xf32>
    %4 = arith.divf %2, %3 : vector<1x128xf32>
    %5 = vector.broadcast %4 : vector<1x128xf32> to vector<16x128xf32>
    %6 = arith.subf %0, %5 : vector<16x128xf32>
    %7 = arith.mulf %6, %6 : vector<16x128xf32>
    %cst_2 = arith.constant dense<0.000000e+00> : vector<128xf32>
    %8 = vector.multi_reduction <add>, %7, %cst_2 [0] : vector<16x128xf32> to vector<128xf32>
    %9 = vector.shape_cast %8 : vector<128xf32> to vector<1x128xf32>
    %cst_3 = arith.constant 1.600000e+01 : f32
    %10 = vector.broadcast %cst_3 : f32 to vector<1x128xf32>
    %11 = arith.divf %9, %10 : vector<1x128xf32>
    %12 = vector.broadcast %4 : vector<1x128xf32> to vector<16x128xf32>
    %13 = arith.subf %0, %12 : vector<16x128xf32>
    %cst_4 = arith.constant 9.99999974E-6 : f32
    %14 = vector.broadcast %cst_4 : f32 to vector<1x128xf32>
    %15 = arith.addf %11, %14 : vector<1x128xf32>
    %16 = math.rsqrt %15 : vector<1x128xf32>
    %17 = vector.broadcast %16 : vector<1x128xf32> to vector<16x128xf32>
    %18 = arith.mulf %13, %17 : vector<16x128xf32>
    %c0_5 = arith.constant 0 : index
    %c0_6 = arith.constant 0 : index
    %19 = vector.load %arg5[%c0_5, %c0_6] : memref<16x1xf32, #tpu.memory_space<vmem>>, vector<16x1xf32>
    %20 = vector.broadcast %19 : vector<16x1xf32> to vector<16x128xf32>
    %21 = arith.mulf %18, %20 : vector<16x128xf32>
    %c0_7 = arith.constant 0 : index
    %c0_8 = arith.constant 0 : index
    %22 = vector.load %arg6[%c0_7, %c0_8] : memref<16x1xf32, #tpu.memory_space<vmem>>, vector<16x1xf32>
    %23 = vector.broadcast %22 : vector<16x1xf32> to vector<16x128xf32>
    %24 = arith.addf %21, %23 : vector<16x128xf32>
    %c0_9 = arith.constant 0 : index
    %c0_10 = arith.constant 0 : index
    %25 = vector.load %arg7[%c0_9, %c0_10] : memref<40x16xbf16, #tpu.memory_space<vmem>>, vector<40x16xbf16>
    %26 = arith.truncf %24 : vector<16x128xf32> to vector<16x128xbf16>
    %cst_11 = arith.constant dense<0.000000e+00> : vector<40x128xf32>
    %27 = tpu.matmul %25, %26, %cst_11 {dimension_numbers = #tpu.dot_dimension_numbers<[1], [0], [0], [1], [0, 0, 1, 1], [], []>} : vector<40x16xbf16>, vector<16x128xbf16>, vector<40x128xf32> -> vector<40x128xf32>
    %c0_12 = arith.constant 0 : index
    %c0_13 = arith.constant 0 : index
    %28 = vector.load %arg8[%c0_12, %c0_13] : memref<40x1xf32, #tpu.memory_space<vmem>>, vector<40x1xf32>
    %29 = vector.broadcast %28 : vector<40x1xf32> to vector<40x128xf32>
    %30 = arith.addf %27, %29 : vector<40x128xf32>
    %31 = vector.extract_strided_slice %30 {offsets = [0, 0], sizes = [32, 128], strides = [1, 1]} : vector<40x128xf32> to vector<32x128xf32>
    %32 = vector.extract_strided_slice %30 {offsets = [32, 0], sizes = [8, 128], strides = [1, 1]} : vector<40x128xf32> to vector<8x128xf32>
    %c0_14 = arith.constant 0 : index
    %c0_15 = arith.constant 0 : index
    %33 = vector.load %arg9[%c0_14, %c0_15] : memref<32x32xbf16, #tpu.memory_space<vmem>>, vector<32x32xbf16>
    %34 = arith.truncf %31 : vector<32x128xf32> to vector<32x128xbf16>
    %cst_16 = arith.constant dense<0.000000e+00> : vector<32x128xf32>
    %35 = tpu.matmul %33, %34, %cst_16 {dimension_numbers = #tpu.dot_dimension_numbers<[1], [0], [0], [1], [0, 0, 1, 1], [], []>} : vector<32x32xbf16>, vector<32x128xbf16>, vector<32x128xf32> -> vector<32x128xf32>
    %c0_17 = arith.constant 0 : index
    %c0_18 = arith.constant 0 : index
    %36 = vector.load %arg10[%c0_17, %c0_18] : memref<32x1xf32, #tpu.memory_space<vmem>>, vector<32x1xf32>
    %37 = vector.broadcast %36 : vector<32x1xf32> to vector<32x128xf32>
    %38 = arith.addf %35, %37 : vector<32x128xf32>
    %39 = arith.negf %38 : vector<32x128xf32>
    %40 = math.exp %39 : vector<32x128xf32>
    %cst_19 = arith.constant 1.000000e+00 : f32
    %41 = vector.broadcast %cst_19 : f32 to vector<32x128xf32>
    %42 = arith.addf %41, %40 : vector<32x128xf32>
    %43 = arith.divf %41, %42 : vector<32x128xf32>
    %44 = arith.mulf %38, %43 : vector<32x128xf32>
    %c0_20 = arith.constant 0 : index
    %c0_21 = arith.constant 0 : index
    %45 = vector.load %arg11[%c0_20, %c0_21] : memref<28x32xbf16, #tpu.memory_space<vmem>>, vector<28x32xbf16>
    %46 = arith.truncf %44 : vector<32x128xf32> to vector<32x128xbf16>
    %cst_22 = arith.constant dense<0.000000e+00> : vector<28x128xf32>
    %47 = tpu.matmul %45, %46, %cst_22 {dimension_numbers = #tpu.dot_dimension_numbers<[1], [0], [0], [1], [0, 0, 1, 1], [], []>} : vector<28x32xbf16>, vector<32x128xbf16>, vector<28x128xf32> -> vector<28x128xf32>
    %c0_23 = arith.constant 0 : index
    %c0_24 = arith.constant 0 : index
    %48 = vector.load %arg12[%c0_23, %c0_24] : memref<28x1xf32, #tpu.memory_space<vmem>>, vector<28x1xf32>
    %49 = vector.broadcast %48 : vector<28x1xf32> to vector<28x128xf32>
    %50 = arith.addf %47, %49 : vector<28x128xf32>
    %51 = vector.extract_strided_slice %50 {offsets = [0, 0], sizes = [8, 128], strides = [1, 1]} : vector<28x128xf32> to vector<8x128xf32>
    %52 = vector.extract_strided_slice %50 {offsets = [8, 0], sizes = [8, 128], strides = [1, 1]} : vector<28x128xf32> to vector<8x128xf32>
    %cst_25 = arith.constant 5.000000e-01 : f32
    %53 = vector.broadcast %cst_25 : f32 to vector<8x128xf32>
    %54 = arith.mulf %52, %53 : vector<8x128xf32>
    %55 = vector.extract_strided_slice %50 {offsets = [16, 0], sizes = [8, 128], strides = [1, 1]} : vector<28x128xf32> to vector<8x128xf32>
    %56 = vector.extract_strided_slice %50 {offsets = [24, 0], sizes = [2, 128], strides = [1, 1]} : vector<28x128xf32> to vector<2x128xf32>
    %57 = vector.extract_strided_slice %50 {offsets = [26, 0], sizes = [2, 128], strides = [1, 1]} : vector<28x128xf32> to vector<2x128xf32>
    %c0_26 = arith.constant 0 : index
    %c0_27 = arith.constant 0 : index
    %58 = vector.load %arg13[%c0_26, %c0_27] : memref<16x32xbf16, #tpu.memory_space<vmem>>, vector<16x32xbf16>
    %59 = arith.truncf %31 : vector<32x128xf32> to vector<32x128xbf16>
    %cst_28 = arith.constant dense<0.000000e+00> : vector<16x128xf32>
    %60 = tpu.matmul %58, %59, %cst_28 {dimension_numbers = #tpu.dot_dimension_numbers<[1], [0], [0], [1], [0, 0, 1, 1], [], []>} : vector<16x32xbf16>, vector<32x128xbf16>, vector<16x128xf32> -> vector<16x128xf32>
    %c0_29 = arith.constant 0 : index
    %c0_30 = arith.constant 0 : index
    %61 = vector.load %arg14[%c0_29, %c0_30] : memref<16x1xf32, #tpu.memory_space<vmem>>, vector<16x1xf32>
    %62 = vector.broadcast %61 : vector<16x1xf32> to vector<16x128xf32>
    %63 = arith.addf %60, %62 : vector<16x128xf32>
    %64 = vector.extract_strided_slice %63 {offsets = [0, 0], sizes = [8, 128], strides = [1, 1]} : vector<16x128xf32> to vector<8x128xf32>
    %65 = vector.extract_strided_slice %63 {offsets = [8, 0], sizes = [8, 128], strides = [1, 1]} : vector<16x128xf32> to vector<8x128xf32>
    %66 = arith.negf %65 : vector<8x128xf32>
    %67 = math.exp %66 : vector<8x128xf32>
    %cst_31 = arith.constant 1.000000e+00 : f32
    %68 = vector.broadcast %cst_31 : f32 to vector<8x128xf32>
    %69 = arith.addf %68, %67 : vector<8x128xf32>
    %70 = arith.divf %68, %69 : vector<8x128xf32>
    %c0_32 = arith.constant 0 : index
    %c0_33 = arith.constant 0 : index
    %71 = vector.load %arg4[%c0_32, %c0_33] : memref<2x128xf32, #tpu.memory_space<vmem>>, vector<2x128xf32>
    %72 = arith.addf %57, %71 : vector<2x128xf32>
    %73 = arith.maximumf %72, %56 : vector<2x128xf32>
    %74 = arith.subf %56, %73 : vector<2x128xf32>
    %75 = math.exp %74 : vector<2x128xf32>
    %76 = arith.subf %57, %73 : vector<2x128xf32>
    %77 = arith.addf %76, %71 : vector<2x128xf32>
    %78 = math.exp %77 : vector<2x128xf32>
    %c0_34 = arith.constant 0 : index
    %c0_35 = arith.constant 0 : index
    %79 = vector.load %arg24[%c0_34, %c0_35] : memref<2x128xf32, #tpu.memory_space<vmem>>, vector<2x128xf32>
    tpu.vector_store %arg24[%c0_34, %c0_35], %73 {strides = array<i32>} : memref<2x128xf32, #tpu.memory_space<vmem>>, vector<2x128xf32>,
    %c0_36 = arith.constant 0 : index
    %c0_37 = arith.constant 0 : index
    %80 = vector.load %arg19[%c0_36, %c0_37] : memref<8x1xf32, #tpu.memory_space<vmem>>, vector<8x1xf32>
    %c0_38 = arith.constant 0 : index
    %c0_39 = arith.constant 0 : index
    %81 = vector.load %arg20[%c0_38, %c0_39] : memref<8x1xf32, #tpu.memory_space<vmem>>, vector<8x1xf32>
    %82 = vector.extract_strided_slice %75 {offsets = [0, 0], sizes = [1, 128], strides = [1, 1]} : vector<2x128xf32> to vector<1x128xf32>
    %83 = vector.extract_strided_slice %78 {offsets = [0, 0], sizes = [1, 128], strides = [1, 1]} : vector<2x128xf32> to vector<1x128xf32>
    %84 = vector.extract_strided_slice %51 {offsets = [0, 0], sizes = [4, 128], strides = [1, 1]} : vector<8x128xf32> to vector<4x128xf32>
    %85 = vector.extract_strided_slice %54 {offsets = [0, 0], sizes = [4, 128], strides = [1, 1]} : vector<8x128xf32> to vector<4x128xf32>
    %86 = vector.extract_strided_slice %64 {offsets = [0, 0], sizes = [4, 128], strides = [1, 1]} : vector<8x128xf32> to vector<4x128xf32>
    %c0_40 = arith.constant 0 : index
    %c0_41 = arith.constant 0 : index
    %87 = vector.load %arg3[%c0_40, %c0_41] : memref<8x128xf32, #tpu.memory_space<vmem>>, vector<4x128xf32>
    %88 = vector.broadcast %83 : vector<1x128xf32> to vector<4x128xf32>
    %89 = arith.mulf %88, %87 : vector<4x128xf32>
    %90 = vector.broadcast %82 : vector<1x128xf32> to vector<4x128xf32>
    %91 = arith.mulf %90, %85 : vector<4x128xf32>
    %92 = arith.addf %89, %91 : vector<4x128xf32>
    %c0_42 = arith.constant 0 : index
    %c0_43 = arith.constant 0 : index
    %93 = vector.load %arg23[%c0_42, %c0_43] : memref<8x128xf32, #tpu.memory_space<vmem>>, vector<4x128xf32>
    tpu.vector_store %arg23[%c0_42, %c0_43], %92 {strides = array<i32>} : memref<8x128xf32, #tpu.memory_space<vmem>>, vector<4x128xf32>,
    %94 = arith.mulf %92, %84 : vector<4x128xf32>
    %cst_44 = arith.constant dense<0.000000e+00> : vector<128xf32>
    %95 = vector.multi_reduction <add>, %94, %cst_44 [0] : vector<4x128xf32> to vector<128xf32>
    %96 = vector.shape_cast %95 : vector<128xf32> to vector<1x128xf32>
    %cst_45 = arith.constant 1.000000e+00 : f32
    %97 = vector.broadcast %cst_45 : f32 to vector<1x128xf32>
    %98 = arith.maximumf %96, %97 : vector<1x128xf32>
    %99 = tpu.reciprocal %98 {approx = true} : vector<1x128xf32> -> vector<1x128xf32>
    %c0_46 = arith.constant 0 : index
    %c0_47 = arith.constant 0 : index
    %100 = vector.load %arg2[%c0_46, %c0_47] : memref<32x128xf32, #tpu.memory_space<vmem>>, vector<4x128xf32>
    %101 = vector.broadcast %83 : vector<1x128xf32> to vector<4x128xf32>
    %102 = arith.mulf %101, %100 : vector<4x128xf32>
    %103 = vector.extract_strided_slice %86 {offsets = [0, 0], sizes = [1, 128], strides = [1, 1]} : vector<4x128xf32> to vector<1x128xf32>
    %104 = arith.mulf %82, %103 : vector<1x128xf32>
    %105 = vector.broadcast %104 : vector<1x128xf32> to vector<4x128xf32>
    %106 = arith.mulf %105, %85 : vector<4x128xf32>
    %107 = arith.addf %102, %106 : vector<4x128xf32>
    %c0_48 = arith.constant 0 : index
    %c0_49 = arith.constant 0 : index
    %108 = vector.load %arg22[%c0_48, %c0_49] : memref<32x128xf32, #tpu.memory_space<vmem>>, vector<4x128xf32>
    tpu.vector_store %arg22[%c0_48, %c0_49], %107 {strides = array<i32>} : memref<32x128xf32, #tpu.memory_space<vmem>>, vector<4x128xf32>,
    %109 = arith.mulf %107, %84 : vector<4x128xf32>
    %cst_50 = arith.constant dense<0.000000e+00> : vector<128xf32>
    %110 = vector.multi_reduction <add>, %109, %cst_50 [0] : vector<4x128xf32> to vector<128xf32>
    %111 = vector.shape_cast %110 : vector<128xf32> to vector<1x128xf32>
    %112 = vector.extract_strided_slice %70 {offsets = [0, 0], sizes = [1, 128], strides = [1, 1]} : vector<8x128xf32> to vector<1x128xf32>
    %113 = arith.mulf %112, %111 : vector<1x128xf32>
    %114 = arith.mulf %113, %99 : vector<1x128xf32>
    %c0_51 = arith.constant 0 : index
    %c0_52 = arith.constant 0 : index
    %115 = vector.load %arg25[%c0_51, %c0_52] : memref<8x128xf32, #tpu.memory_space<vmem>>, vector<1x128xf32>
    tpu.vector_store %arg25[%c0_51, %c0_52], %114 {strides = array<i32>} : memref<8x128xf32, #tpu.memory_space<vmem>>, vector<1x128xf32>,
    %c4 = arith.constant 4 : index
    %c0_53 = arith.constant 0 : index
    %116 = vector.load %arg2[%c4, %c0_53] : memref<32x128xf32, #tpu.memory_space<vmem>>, vector<4x128xf32>
    %117 = vector.broadcast %83 : vector<1x128xf32> to vector<4x128xf32>
    %118 = arith.mulf %117, %116 : vector<4x128xf32>
    %119 = vector.extract_strided_slice %86 {offsets = [1, 0], sizes = [1, 128], strides = [1, 1]} : vector<4x128xf32> to vector<1x128xf32>
    %120 = arith.mulf %82, %119 : vector<1x128xf32>
    %121 = vector.broadcast %120 : vector<1x128xf32> to vector<4x128xf32>
    %122 = arith.mulf %121, %85 : vector<4x128xf32>
    %123 = arith.addf %118, %122 : vector<4x128xf32>
    %c4_54 = arith.constant 4 : index
    %c0_55 = arith.constant 0 : index
    %124 = vector.load %arg22[%c4_54, %c0_55] : memref<32x128xf32, #tpu.memory_space<vmem>>, vector<4x128xf32>
    tpu.vector_store %arg22[%c4_54, %c0_55], %123 {strides = array<i32>} : memref<32x128xf32, #tpu.memory_space<vmem>>, vector<4x128xf32>,
    %125 = arith.mulf %123, %84 : vector<4x128xf32>
    %cst_56 = arith.constant dense<0.000000e+00> : vector<128xf32>
    %126 = vector.multi_reduction <add>, %125, %cst_56 [0] : vector<4x128xf32> to vector<128xf32>
    %127 = vector.shape_cast %126 : vector<128xf32> to vector<1x128xf32>
    %128 = vector.extract_strided_slice %70 {offsets = [1, 0], sizes = [1, 128], strides = [1, 1]} : vector<8x128xf32> to vector<1x128xf32>
    %129 = arith.mulf %128, %127 : vector<1x128xf32>
    %130 = arith.mulf %129, %99 : vector<1x128xf32>
    %c1 = arith.constant 1 : index
    %c0_57 = arith.constant 0 : index
    %131 = vector.load %arg25[%c1, %c0_57] : memref<8x128xf32, #tpu.memory_space<vmem>>, vector<1x128xf32>
    tpu.vector_store %arg25[%c1, %c0_57], %130 {strides = array<i32>} : memref<8x128xf32, #tpu.memory_space<vmem>>, vector<1x128xf32>,
    %c8 = arith.constant 8 : index
    %c0_58 = arith.constant 0 : index
    %132 = vector.load %arg2[%c8, %c0_58] : memref<32x128xf32, #tpu.memory_space<vmem>>, vector<4x128xf32>
    %133 = vector.broadcast %83 : vector<1x128xf32> to vector<4x128xf32>
    %134 = arith.mulf %133, %132 : vector<4x128xf32>
    %135 = vector.extract_strided_slice %86 {offsets = [2, 0], sizes = [1, 128], strides = [1, 1]} : vector<4x128xf32> to vector<1x128xf32>
    %136 = arith.mulf %82, %135 : vector<1x128xf32>
    %137 = vector.broadcast %136 : vector<1x128xf32> to vector<4x128xf32>
    %138 = arith.mulf %137, %85 : vector<4x128xf32>
    %139 = arith.addf %134, %138 : vector<4x128xf32>
    %c8_59 = arith.constant 8 : index
    %c0_60 = arith.constant 0 : index
    %140 = vector.load %arg22[%c8_59, %c0_60] : memref<32x128xf32, #tpu.memory_space<vmem>>, vector<4x128xf32>
    tpu.vector_store %arg22[%c8_59, %c0_60], %139 {strides = array<i32>} : memref<32x128xf32, #tpu.memory_space<vmem>>, vector<4x128xf32>,
    %141 = arith.mulf %139, %84 : vector<4x128xf32>
    %cst_61 = arith.constant dense<0.000000e+00> : vector<128xf32>
    %142 = vector.multi_reduction <add>, %141, %cst_61 [0] : vector<4x128xf32> to vector<128xf32>
    %143 = vector.shape_cast %142 : vector<128xf32> to vector<1x128xf32>
    %144 = vector.extract_strided_slice %70 {offsets = [2, 0], sizes = [1, 128], strides = [1, 1]} : vector<8x128xf32> to vector<1x128xf32>
    %145 = arith.mulf %144, %143 : vector<1x128xf32>
    %146 = arith.mulf %145, %99 : vector<1x128xf32>
    %c2 = arith.constant 2 : index
    %c0_62 = arith.constant 0 : index
    %147 = vector.load %arg25[%c2, %c0_62] : memref<8x128xf32, #tpu.memory_space<vmem>>, vector<1x128xf32>
    tpu.vector_store %arg25[%c2, %c0_62], %146 {strides = array<i32>} : memref<8x128xf32, #tpu.memory_space<vmem>>, vector<1x128xf32>,
    %c12 = arith.constant 12 : index
    %c0_63 = arith.constant 0 : index
    %148 = vector.load %arg2[%c12, %c0_63] : memref<32x128xf32, #tpu.memory_space<vmem>>, vector<4x128xf32>
    %149 = vector.broadcast %83 : vector<1x128xf32> to vector<4x128xf32>
    %150 = arith.mulf %149, %148 : vector<4x128xf32>
    %151 = vector.extract_strided_slice %86 {offsets = [3, 0], sizes = [1, 128], strides = [1, 1]} : vector<4x128xf32> to vector<1x128xf32>
    %152 = arith.mulf %82, %151 : vector<1x128xf32>
    %153 = vector.broadcast %152 : vector<1x128xf32> to vector<4x128xf32>
    %154 = arith.mulf %153, %85 : vector<4x128xf32>
    %155 = arith.addf %150, %154 : vector<4x128xf32>
    %c12_64 = arith.constant 12 : index
    %c0_65 = arith.constant 0 : index
    %156 = vector.load %arg22[%c12_64, %c0_65] : memref<32x128xf32, #tpu.memory_space<vmem>>, vector<4x128xf32>
    tpu.vector_store %arg22[%c12_64, %c0_65], %155 {strides = array<i32>} : memref<32x128xf32, #tpu.memory_space<vmem>>, vector<4x128xf32>,
    %157 = arith.mulf %155, %84 : vector<4x128xf32>
    %cst_66 = arith.constant dense<0.000000e+00> : vector<128xf32>
    %158 = vector.multi_reduction <add>, %157, %cst_66 [0] : vector<4x128xf32> to vector<128xf32>
    %159 = vector.shape_cast %158 : vector<128xf32> to vector<1x128xf32>
    %160 = vector.extract_strided_slice %70 {offsets = [3, 0], sizes = [1, 128], strides = [1, 1]} : vector<8x128xf32> to vector<1x128xf32>
    %161 = arith.mulf %160, %159 : vector<1x128xf32>
    %162 = arith.mulf %161, %99 : vector<1x128xf32>
    %c3 = arith.constant 3 : index
    %c0_67 = arith.constant 0 : index
    %163 = vector.load %arg25[%c3, %c0_67] : memref<8x128xf32, #tpu.memory_space<vmem>>, vector<1x128xf32>
    tpu.vector_store %arg25[%c3, %c0_67], %162 {strides = array<i32>} : memref<8x128xf32, #tpu.memory_space<vmem>>, vector<1x128xf32>,
    %c0_68 = arith.constant 0 : index
    %c0_69 = arith.constant 0 : index
    %164 = vector.load %arg25[%c0_68, %c0_69] : memref<8x128xf32, #tpu.memory_space<vmem>>, vector<4x128xf32>
    %cst_70 = arith.constant dense<0.000000e+00> : vector<128xf32>
    %165 = vector.multi_reduction <add>, %164, %cst_70 [0] : vector<4x128xf32> to vector<128xf32>
    %166 = vector.shape_cast %165 : vector<128xf32> to vector<1x128xf32>
    %cst_71 = arith.constant 4.000000e+00 : f32
    %167 = vector.broadcast %cst_71 : f32 to vector<1x128xf32>
    %168 = arith.divf %166, %167 : vector<1x128xf32>
    %169 = vector.broadcast %168 : vector<1x128xf32> to vector<4x128xf32>
    %170 = arith.subf %164, %169 : vector<4x128xf32>
    %171 = arith.mulf %170, %170 : vector<4x128xf32>
    %cst_72 = arith.constant dense<0.000000e+00> : vector<128xf32>
    %172 = vector.multi_reduction <add>, %171, %cst_72 [0] : vector<4x128xf32> to vector<128xf32>
    %173 = vector.shape_cast %172 : vector<128xf32> to vector<1x128xf32>
    %cst_73 = arith.constant 4.000000e+00 : f32
    %174 = vector.broadcast %cst_73 : f32 to vector<1x128xf32>
    %175 = arith.divf %173, %174 : vector<1x128xf32>
    %cst_74 = arith.constant 9.99999974E-6 : f32
    %176 = vector.broadcast %cst_74 : f32 to vector<1x128xf32>
    %177 = arith.addf %175, %176 : vector<1x128xf32>
    %178 = math.rsqrt %177 : vector<1x128xf32>
    %179 = vector.broadcast %178 : vector<1x128xf32> to vector<4x128xf32>
    %180 = arith.mulf %170, %179 : vector<4x128xf32>
    %181 = vector.extract_strided_slice %80 {offsets = [0, 0], sizes = [4, 1], strides = [1, 1]} : vector<8x1xf32> to vector<4x1xf32>
    %182 = vector.broadcast %181 : vector<4x1xf32> to vector<4x128xf32>
    %183 = arith.mulf %180, %182 : vector<4x128xf32>
    %184 = vector.extract_strided_slice %81 {offsets = [0, 0], sizes = [4, 1], strides = [1, 1]} : vector<8x1xf32> to vector<4x1xf32>
    %185 = vector.broadcast %184 : vector<4x1xf32> to vector<4x128xf32>
    %186 = arith.addf %183, %185 : vector<4x128xf32>
    %187 = vector.extract_strided_slice %55 {offsets = [0, 0], sizes = [4, 128], strides = [1, 1]} : vector<8x128xf32> to vector<4x128xf32>
    %188 = arith.addf %186, %187 : vector<4x128xf32>
    %c0_75 = arith.constant 0 : index
    %c0_76 = arith.constant 0 : index
    %189 = vector.load %arg25[%c0_75, %c0_76] : memref<8x128xf32, #tpu.memory_space<vmem>>, vector<4x128xf32>
    tpu.vector_store %arg25[%c0_75, %c0_76], %188 {strides = array<i32>} : memref<8x128xf32, #tpu.memory_space<vmem>>, vector<4x128xf32>,
    %190 = vector.extract_strided_slice %75 {offsets = [1, 0], sizes = [1, 128], strides = [1, 1]} : vector<2x128xf32> to vector<1x128xf32>
    %191 = vector.extract_strided_slice %78 {offsets = [1, 0], sizes = [1, 128], strides = [1, 1]} : vector<2x128xf32> to vector<1x128xf32>
    %192 = vector.extract_strided_slice %51 {offsets = [4, 0], sizes = [4, 128], strides = [1, 1]} : vector<8x128xf32> to vector<4x128xf32>
    %193 = vector.extract_strided_slice %54 {offsets = [4, 0], sizes = [4, 128], strides = [1, 1]} : vector<8x128xf32> to vector<4x128xf32>
    %194 = vector.extract_strided_slice %64 {offsets = [4, 0], sizes = [4, 128], strides = [1, 1]} : vector<8x128xf32> to vector<4x128xf32>
    %c4_77 = arith.constant 4 : index
    %c0_78 = arith.constant 0 : index
    %195 = vector.load %arg3[%c4_77, %c0_78] : memref<8x128xf32, #tpu.memory_space<vmem>>, vector<4x128xf32>
    %196 = vector.broadcast %191 : vector<1x128xf32> to vector<4x128xf32>
    %197 = arith.mulf %196, %195 : vector<4x128xf32>
    %198 = vector.broadcast %190 : vector<1x128xf32> to vector<4x128xf32>
    %199 = arith.mulf %198, %193 : vector<4x128xf32>
    %200 = arith.addf %197, %199 : vector<4x128xf32>
    %c4_79 = arith.constant 4 : index
    %c0_80 = arith.constant 0 : index
    %201 = vector.load %arg23[%c4_79, %c0_80] : memref<8x128xf32, #tpu.memory_space<vmem>>, vector<4x128xf32>
    tpu.vector_store %arg23[%c4_79, %c0_80], %200 {strides = array<i32>} : memref<8x128xf32, #tpu.memory_space<vmem>>, vector<4x128xf32>,
    %202 = arith.mulf %200, %192 : vector<4x128xf32>
    %cst_81 = arith.constant dense<0.000000e+00> : vector<128xf32>
    %203 = vector.multi_reduction <add>, %202, %cst_81 [0] : vector<4x128xf32> to vector<128xf32>
    %204 = vector.shape_cast %203 : vector<128xf32> to vector<1x128xf32>
    %cst_82 = arith.constant 1.000000e+00 : f32
    %205 = vector.broadcast %cst_82 : f32 to vector<1x128xf32>
    %206 = arith.maximumf %204, %205 : vector<1x128xf32>
    %207 = tpu.reciprocal %206 {approx = true} : vector<1x128xf32> -> vector<1x128xf32>
    %c16 = arith.constant 16 : index
    %c0_83 = arith.constant 0 : index
    %208 = vector.load %arg2[%c16, %c0_83] : memref<32x128xf32, #tpu.memory_space<vmem>>, vector<4x128xf32>
    %209 = vector.broadcast %191 : vector<1x128xf32> to vector<4x128xf32>
    %210 = arith.mulf %209, %208 : vector<4x128xf32>
    %211 = vector.extract_strided_slice %194 {offsets = [0, 0], sizes = [1, 128], strides = [1, 1]} : vector<4x128xf32> to vector<1x128xf32>
    %212 = arith.mulf %190, %211 : vector<1x128xf32>
    %213 = vector.broadcast %212 : vector<1x128xf32> to vector<4x128xf32>
    %214 = arith.mulf %213, %193 : vector<4x128xf32>
    %215 = arith.addf %210, %214 : vector<4x128xf32>
    %c16_84 = arith.constant 16 : index
    %c0_85 = arith.constant 0 : index
    %216 = vector.load %arg22[%c16_84, %c0_85] : memref<32x128xf32, #tpu.memory_space<vmem>>, vector<4x128xf32>
    tpu.vector_store %arg22[%c16_84, %c0_85], %215 {strides = array<i32>} : memref<32x128xf32, #tpu.memory_space<vmem>>, vector<4x128xf32>,
    %217 = arith.mulf %215, %192 : vector<4x128xf32>
    %cst_86 = arith.constant dense<0.000000e+00> : vector<128xf32>
    %218 = vector.multi_reduction <add>, %217, %cst_86 [0] : vector<4x128xf32> to vector<128xf32>
    %219 = vector.shape_cast %218 : vector<128xf32> to vector<1x128xf32>
    %220 = vector.extract_strided_slice %70 {offsets = [4, 0], sizes = [1, 128], strides = [1, 1]} : vector<8x128xf32> to vector<1x128xf32>
    %221 = arith.mulf %220, %219 : vector<1x128xf32>
    %222 = arith.mulf %221, %207 : vector<1x128xf32>
    %c4_87 = arith.constant 4 : index
    %c0_88 = arith.constant 0 : index
    %223 = vector.load %arg25[%c4_87, %c0_88] : memref<8x128xf32, #tpu.memory_space<vmem>>, vector<1x128xf32>
    tpu.vector_store %arg25[%c4_87, %c0_88], %222 {strides = array<i32>} : memref<8x128xf32, #tpu.memory_space<vmem>>, vector<1x128xf32>,
    %c20 = arith.constant 20 : index
    %c0_89 = arith.constant 0 : index
    %224 = vector.load %arg2[%c20, %c0_89] : memref<32x128xf32, #tpu.memory_space<vmem>>, vector<4x128xf32>
    %225 = vector.broadcast %191 : vector<1x128xf32> to vector<4x128xf32>
    %226 = arith.mulf %225, %224 : vector<4x128xf32>
    %227 = vector.extract_strided_slice %194 {offsets = [1, 0], sizes = [1, 128], strides = [1, 1]} : vector<4x128xf32> to vector<1x128xf32>
    %228 = arith.mulf %190, %227 : vector<1x128xf32>
    %229 = vector.broadcast %228 : vector<1x128xf32> to vector<4x128xf32>
    %230 = arith.mulf %229, %193 : vector<4x128xf32>
    %231 = arith.addf %226, %230 : vector<4x128xf32>
    %c20_90 = arith.constant 20 : index
    %c0_91 = arith.constant 0 : index
    %232 = vector.load %arg22[%c20_90, %c0_91] : memref<32x128xf32, #tpu.memory_space<vmem>>, vector<4x128xf32>
    tpu.vector_store %arg22[%c20_90, %c0_91], %231 {strides = array<i32>} : memref<32x128xf32, #tpu.memory_space<vmem>>, vector<4x128xf32>,
    %233 = arith.mulf %231, %192 : vector<4x128xf32>
    %cst_92 = arith.constant dense<0.000000e+00> : vector<128xf32>
    %234 = vector.multi_reduction <add>, %233, %cst_92 [0] : vector<4x128xf32> to vector<128xf32>
    %235 = vector.shape_cast %234 : vector<128xf32> to vector<1x128xf32>
    %236 = vector.extract_strided_slice %70 {offsets = [5, 0], sizes = [1, 128], strides = [1, 1]} : vector<8x128xf32> to vector<1x128xf32>
    %237 = arith.mulf %236, %235 : vector<1x128xf32>
    %238 = arith.mulf %237, %207 : vector<1x128xf32>
    %c5 = arith.constant 5 : index
    %c0_93 = arith.constant 0 : index
    %239 = vector.load %arg25[%c5, %c0_93] : memref<8x128xf32, #tpu.memory_space<vmem>>, vector<1x128xf32>
    tpu.vector_store %arg25[%c5, %c0_93], %238 {strides = array<i32>} : memref<8x128xf32, #tpu.memory_space<vmem>>, vector<1x128xf32>,
    %c24 = arith.constant 24 : index
    %c0_94 = arith.constant 0 : index
    %240 = vector.load %arg2[%c24, %c0_94] : memref<32x128xf32, #tpu.memory_space<vmem>>, vector<4x128xf32>
    %241 = vector.broadcast %191 : vector<1x128xf32> to vector<4x128xf32>
    %242 = arith.mulf %241, %240 : vector<4x128xf32>
    %243 = vector.extract_strided_slice %194 {offsets = [2, 0], sizes = [1, 128], strides = [1, 1]} : vector<4x128xf32> to vector<1x128xf32>
    %244 = arith.mulf %190, %243 : vector<1x128xf32>
    %245 = vector.broadcast %244 : vector<1x128xf32> to vector<4x128xf32>
    %246 = arith.mulf %245, %193 : vector<4x128xf32>
    %247 = arith.addf %242, %246 : vector<4x128xf32>
    %c24_95 = arith.constant 24 : index
    %c0_96 = arith.constant 0 : index
    %248 = vector.load %arg22[%c24_95, %c0_96] : memref<32x128xf32, #tpu.memory_space<vmem>>, vector<4x128xf32>
    tpu.vector_store %arg22[%c24_95, %c0_96], %247 {strides = array<i32>} : memref<32x128xf32, #tpu.memory_space<vmem>>, vector<4x128xf32>,
    %249 = arith.mulf %247, %192 : vector<4x128xf32>
    %cst_97 = arith.constant dense<0.000000e+00> : vector<128xf32>
    %250 = vector.multi_reduction <add>, %249, %cst_97 [0] : vector<4x128xf32> to vector<128xf32>
    %251 = vector.shape_cast %250 : vector<128xf32> to vector<1x128xf32>
    %252 = vector.extract_strided_slice %70 {offsets = [6, 0], sizes = [1, 128], strides = [1, 1]} : vector<8x128xf32> to vector<1x128xf32>
    %253 = arith.mulf %252, %251 : vector<1x128xf32>
    %254 = arith.mulf %253, %207 : vector<1x128xf32>
    %c6 = arith.constant 6 : index
    %c0_98 = arith.constant 0 : index
    %255 = vector.load %arg25[%c6, %c0_98] : memref<8x128xf32, #tpu.memory_space<vmem>>, vector<1x128xf32>
    tpu.vector_store %arg25[%c6, %c0_98], %254 {strides = array<i32>} : memref<8x128xf32, #tpu.memory_space<vmem>>, vector<1x128xf32>,
    %c28 = arith.constant 28 : index
    %c0_99 = arith.constant 0 : index
    %256 = vector.load %arg2[%c28, %c0_99] : memref<32x128xf32, #tpu.memory_space<vmem>>, vector<4x128xf32>
    %257 = vector.broadcast %191 : vector<1x128xf32> to vector<4x128xf32>
    %258 = arith.mulf %257, %256 : vector<4x128xf32>
    %259 = vector.extract_strided_slice %194 {offsets = [3, 0], sizes = [1, 128], strides = [1, 1]} : vector<4x128xf32> to vector<1x128xf32>
    %260 = arith.mulf %190, %259 : vector<1x128xf32>
    %261 = vector.broadcast %260 : vector<1x128xf32> to vector<4x128xf32>
    %262 = arith.mulf %261, %193 : vector<4x128xf32>
    %263 = arith.addf %258, %262 : vector<4x128xf32>
    %c28_100 = arith.constant 28 : index
    %c0_101 = arith.constant 0 : index
    %264 = vector.load %arg22[%c28_100, %c0_101] : memref<32x128xf32, #tpu.memory_space<vmem>>, vector<4x128xf32>
    tpu.vector_store %arg22[%c28_100, %c0_101], %263 {strides = array<i32>} : memref<32x128xf32, #tpu.memory_space<vmem>>, vector<4x128xf32>,
    %265 = arith.mulf %263, %192 : vector<4x128xf32>
    %cst_102 = arith.constant dense<0.000000e+00> : vector<128xf32>
    %266 = vector.multi_reduction <add>, %265, %cst_102 [0] : vector<4x128xf32> to vector<128xf32>
    %267 = vector.shape_cast %266 : vector<128xf32> to vector<1x128xf32>
    %268 = vector.extract_strided_slice %70 {offsets = [7, 0], sizes = [1, 128], strides = [1, 1]} : vector<8x128xf32> to vector<1x128xf32>
    %269 = arith.mulf %268, %267 : vector<1x128xf32>
    %270 = arith.mulf %269, %207 : vector<1x128xf32>
    %c7 = arith.constant 7 : index
    %c0_103 = arith.constant 0 : index
    %271 = vector.load %arg25[%c7, %c0_103] : memref<8x128xf32, #tpu.memory_space<vmem>>, vector<1x128xf32>
    tpu.vector_store %arg25[%c7, %c0_103], %270 {strides = array<i32>} : memref<8x128xf32, #tpu.memory_space<vmem>>, vector<1x128xf32>,
    %c4_104 = arith.constant 4 : index
    %c0_105 = arith.constant 0 : index
    %272 = vector.load %arg25[%c4_104, %c0_105] : memref<8x128xf32, #tpu.memory_space<vmem>>, vector<4x128xf32>
    %cst_106 = arith.constant dense<0.000000e+00> : vector<128xf32>
    %273 = vector.multi_reduction <add>, %272, %cst_106 [0] : vector<4x128xf32> to vector<128xf32>
    %274 = vector.shape_cast %273 : vector<128xf32> to vector<1x128xf32>
    %cst_107 = arith.constant 4.000000e+00 : f32
    %275 = vector.broadcast %cst_107 : f32 to vector<1x128xf32>
    %276 = arith.divf %274, %275 : vector<1x128xf32>
    %277 = vector.broadcast %276 : vector<1x128xf32> to vector<4x128xf32>
    %278 = arith.subf %272, %277 : vector<4x128xf32>
    %279 = arith.mulf %278, %278 : vector<4x128xf32>
    %cst_108 = arith.constant dense<0.000000e+00> : vector<128xf32>
    %280 = vector.multi_reduction <add>, %279, %cst_108 [0] : vector<4x128xf32> to vector<128xf32>
    %281 = vector.shape_cast %280 : vector<128xf32> to vector<1x128xf32>
    %cst_109 = arith.constant 4.000000e+00 : f32
    %282 = vector.broadcast %cst_109 : f32 to vector<1x128xf32>
    %283 = arith.divf %281, %282 : vector<1x128xf32>
    %cst_110 = arith.constant 9.99999974E-6 : f32
    %284 = vector.broadcast %cst_110 : f32 to vector<1x128xf32>
    %285 = arith.addf %283, %284 : vector<1x128xf32>
    %286 = math.rsqrt %285 : vector<1x128xf32>
    %287 = vector.broadcast %286 : vector<1x128xf32> to vector<4x128xf32>
    %288 = arith.mulf %278, %287 : vector<4x128xf32>
    %289 = vector.extract_strided_slice %80 {offsets = [4, 0], sizes = [4, 1], strides = [1, 1]} : vector<8x1xf32> to vector<4x1xf32>
    %290 = vector.broadcast %289 : vector<4x1xf32> to vector<4x128xf32>
    %291 = arith.mulf %288, %290 : vector<4x128xf32>
    %292 = vector.extract_strided_slice %81 {offsets = [4, 0], sizes = [4, 1], strides = [1, 1]} : vector<8x1xf32> to vector<4x1xf32>
    %293 = vector.broadcast %292 : vector<4x1xf32> to vector<4x128xf32>
    %294 = arith.addf %291, %293 : vector<4x128xf32>
    %295 = vector.extract_strided_slice %55 {offsets = [4, 0], sizes = [4, 128], strides = [1, 1]} : vector<8x128xf32> to vector<4x128xf32>
    %296 = arith.addf %294, %295 : vector<4x128xf32>
    %c4_111 = arith.constant 4 : index
    %c0_112 = arith.constant 0 : index
    %297 = vector.load %arg25[%c4_111, %c0_112] : memref<8x128xf32, #tpu.memory_space<vmem>>, vector<4x128xf32>
    tpu.vector_store %arg25[%c4_111, %c0_112], %296 {strides = array<i32>} : memref<8x128xf32, #tpu.memory_space<vmem>>, vector<4x128xf32>,
    %c0_113 = arith.constant 0 : index
    %c0_114 = arith.constant 0 : index
    %298 = vector.load %arg25[%c0_113, %c0_114] : memref<8x128xf32, #tpu.memory_space<vmem>>, vector<8x128xf32>
    %299 = arith.negf %32 : vector<8x128xf32>
    %300 = math.exp %299 : vector<8x128xf32>
    %cst_115 = arith.constant 1.000000e+00 : f32
    %301 = vector.broadcast %cst_115 : f32 to vector<8x128xf32>
    %302 = arith.addf %301, %300 : vector<8x128xf32>
    %303 = arith.divf %301, %302 : vector<8x128xf32>
    %304 = arith.mulf %32, %303 : vector<8x128xf32>
    %305 = arith.mulf %298, %304 : vector<8x128xf32>
    %c0_116 = arith.constant 0 : index
    %c0_117 = arith.constant 0 : index
    %306 = vector.load %arg15[%c0_116, %c0_117] : memref<16x8xbf16, #tpu.memory_space<vmem>>, vector<16x8xbf16>
    %307 = arith.truncf %305 : vector<8x128xf32> to vector<8x128xbf16>
    %cst_118 = arith.constant dense<0.000000e+00> : vector<16x128xf32>
    %308 = tpu.matmul %306, %307, %cst_118 {dimension_numbers = #tpu.dot_dimension_numbers<[1], [0], [0], [1], [0, 0, 1, 1], [], []>} : vector<16x8xbf16>, vector<8x128xbf16>, vector<16x128xf32> -> vector<16x128xf32>
    %c0_119 = arith.constant 0 : index
    %c0_120 = arith.constant 0 : index
    %309 = vector.load %arg16[%c0_119, %c0_120] : memref<16x1xf32, #tpu.memory_space<vmem>>, vector<16x1xf32>
    %310 = vector.broadcast %309 : vector<16x1xf32> to vector<16x128xf32>
    %311 = arith.addf %308, %310 : vector<16x128xf32>
    %312 = arith.addf %311, %24 : vector<16x128xf32>
    %c0_121 = arith.constant 0 : index
    %c0_122 = arith.constant 0 : index
    %313 = vector.load %arg17[%c0_121, %c0_122] : memref<32x16xbf16, #tpu.memory_space<vmem>>, vector<32x16xbf16>
    %314 = arith.truncf %312 : vector<16x128xf32> to vector<16x128xbf16>
    %cst_123 = arith.constant dense<0.000000e+00> : vector<32x128xf32>
    %315 = tpu.matmul %313, %314, %cst_123 {dimension_numbers = #tpu.dot_dimension_numbers<[1], [0], [0], [1], [0, 0, 1, 1], [], []>} : vector<32x16xbf16>, vector<16x128xbf16>, vector<32x128xf32> -> vector<32x128xf32>
    %c0_124 = arith.constant 0 : index
    %c0_125 = arith.constant 0 : index
    %316 = vector.load %arg18[%c0_124, %c0_125] : memref<32x1xf32, #tpu.memory_space<vmem>>, vector<32x1xf32>
    %317 = vector.broadcast %316 : vector<32x1xf32> to vector<32x128xf32>
    %318 = arith.addf %315, %317 : vector<32x128xf32>
    %c0_126 = arith.constant 0 : index
    %c0_127 = arith.constant 0 : index
    %319 = vector.load %arg21[%c0_126, %c0_127] : memref<32x128xf32, #tpu.memory_space<vmem>>, vector<32x128xf32>
    tpu.vector_store %arg21[%c0_126, %c0_127], %318 {strides = array<i32>} : memref<32x128xf32, #tpu.memory_space<vmem>>, vector<32x128xf32>,
    return
  }
  func.func @transform_0(%arg0: i32) -> (i32, i32) {
    %c0_i32 = arith.constant 0 : i32
    %c0_i32_0 = arith.constant 0 : i32
    return %c0_i32, %arg0 : i32, i32
  }
  func.func @transform_1(%arg0: i32) -> (i32, i32) {
    %c0_i32 = arith.constant 0 : i32
    %c0_i32_0 = arith.constant 0 : i32
    return %c0_i32, %arg0 : i32, i32
  }
  func.func @transform_2(%arg0: i32) -> (i32, i32) {
    %c0_i32 = arith.constant 0 : i32
    %c0_i32_0 = arith.constant 0 : i32
    return %c0_i32, %arg0 : i32, i32
  }
  func.func @transform_3(%arg0: i32) -> (i32, i32) {
    %c0_i32 = arith.constant 0 : i32
    %c0_i32_0 = arith.constant 0 : i32
    return %c0_i32, %arg0 : i32, i32
  }
  func.func @transform_4(%arg0: i32) -> (i32, i32) {
    %c0_i32 = arith.constant 0 : i32
    %c0_i32_0 = arith.constant 0 : i32
    %c0_i32_1 = arith.constant 0 : i32
    return %c0_i32, %c0_i32_0 : i32, i32
  }
  func.func @transform_5(%arg0: i32) -> (i32, i32) {
    %c0_i32 = arith.constant 0 : i32
    %c0_i32_0 = arith.constant 0 : i32
    %c0_i32_1 = arith.constant 0 : i32
    return %c0_i32, %c0_i32_0 : i32, i32
  }
  func.func @transform_6(%arg0: i32) -> (i32, i32) {
    %c0_i32 = arith.constant 0 : i32
    %c0_i32_0 = arith.constant 0 : i32
    %c0_i32_1 = arith.constant 0 : i32
    return %c0_i32, %c0_i32_0 : i32, i32
  }
  func.func @transform_7(%arg0: i32) -> (i32, i32) {
    %c0_i32 = arith.constant 0 : i32
    %c0_i32_0 = arith.constant 0 : i32
    %c0_i32_1 = arith.constant 0 : i32
    return %c0_i32, %c0_i32_0 : i32, i32
  }
  func.func @transform_8(%arg0: i32) -> (i32, i32) {
    %c0_i32 = arith.constant 0 : i32
    %c0_i32_0 = arith.constant 0 : i32
    %c0_i32_1 = arith.constant 0 : i32
    return %c0_i32, %c0_i32_0 : i32, i32
  }
  func.func @transform_9(%arg0: i32) -> (i32, i32) {
    %c0_i32 = arith.constant 0 : i32
    %c0_i32_0 = arith.constant 0 : i32
    %c0_i32_1 = arith.constant 0 : i32
    return %c0_i32, %c0_i32_0 : i32, i32
  }
  func.func @transform_10(%arg0: i32) -> (i32, i32) {
    %c0_i32 = arith.constant 0 : i32
    %c0_i32_0 = arith.constant 0 : i32
    %c0_i32_1 = arith.constant 0 : i32
    return %c0_i32, %c0_i32_0 : i32, i32
  }
  func.func @transform_11(%arg0: i32) -> (i32, i32) {
    %c0_i32 = arith.constant 0 : i32
    %c0_i32_0 = arith.constant 0 : i32
    %c0_i32_1 = arith.constant 0 : i32
    return %c0_i32, %c0_i32_0 : i32, i32
  }
  func.func @transform_12(%arg0: i32) -> (i32, i32) {
    %c0_i32 = arith.constant 0 : i32
    %c0_i32_0 = arith.constant 0 : i32
    %c0_i32_1 = arith.constant 0 : i32
    return %c0_i32, %c0_i32_0 : i32, i32
  }
  func.func @transform_13(%arg0: i32) -> (i32, i32) {
    %c0_i32 = arith.constant 0 : i32
    %c0_i32_0 = arith.constant 0 : i32
    %c0_i32_1 = arith.constant 0 : i32
    return %c0_i32, %c0_i32_0 : i32, i32
  }
  func.func @transform_14(%arg0: i32) -> (i32, i32) {
    %c0_i32 = arith.constant 0 : i32
    %c0_i32_0 = arith.constant 0 : i32
    %c0_i32_1 = arith.constant 0 : i32
    return %c0_i32, %c0_i32_0 : i32, i32
  }
  func.func @transform_15(%arg0: i32) -> (i32, i32) {
    %c0_i32 = arith.constant 0 : i32
    %c0_i32_0 = arith.constant 0 : i32
    %c0_i32_1 = arith.constant 0 : i32
    return %c0_i32, %c0_i32_0 : i32, i32
  }
  func.func @transform_16(%arg0: i32) -> (i32, i32) {
    %c0_i32 = arith.constant 0 : i32
    %c0_i32_0 = arith.constant 0 : i32
    %c0_i32_1 = arith.constant 0 : i32
    return %c0_i32, %c0_i32_0 : i32, i32
  }
  func.func @transform_17(%arg0: i32) -> (i32, i32) {
    %c0_i32 = arith.constant 0 : i32
    %c0_i32_0 = arith.constant 0 : i32
    %c0_i32_1 = arith.constant 0 : i32
    return %c0_i32, %c0_i32_0 : i32, i32
  }
  func.func @transform_18(%arg0: i32) -> (i32, i32) {
    %c0_i32 = arith.constant 0 : i32
    %c0_i32_0 = arith.constant 0 : i32
    %c0_i32_1 = arith.constant 0 : i32
    return %c0_i32, %c0_i32_0 : i32, i32
  }
  func.func @transform_19(%arg0: i32) -> (i32, i32) {
    %c0_i32 = arith.constant 0 : i32
    %c0_i32_0 = arith.constant 0 : i32
    %c0_i32_1 = arith.constant 0 : i32
    return %c0_i32, %c0_i32_0 : i32, i32
  }
  func.func @transform_20(%arg0: i32) -> (i32, i32) {
    %c0_i32 = arith.constant 0 : i32
    %c0_i32_0 = arith.constant 0 : i32
    return %c0_i32, %arg0 : i32, i32
  }
  func.func @transform_21(%arg0: i32) -> (i32, i32) {
    %c0_i32 = arith.constant 0 : i32
    %c0_i32_0 = arith.constant 0 : i32
    return %c0_i32, %arg0 : i32, i32
  }
  func.func @transform_22(%arg0: i32) -> (i32, i32) {
    %c0_i32 = arith.constant 0 : i32
    %c0_i32_0 = arith.constant 0 : i32
    return %c0_i32, %arg0 : i32, i32
  }
  func.func @transform_23(%arg0: i32) -> (i32, i32) {
    %c0_i32 = arith.constant 0 : i32
    %c0_i32_0 = arith.constant 0 : i32
    return %c0_i32, %arg0 : i32, i32
  }
}

</mosaic_0001>

<llo_original>
// kernel: _tgn_mlstm_step.1
$region0: #{_tgn_mlstm_step.1}
  #allocation0 [shape = 'u32[]', space=smem, size = 0x4, offset = 0x4, fixed_abs, tag = 'smem constant byte address 0x4 - core index']
  #allocation1 [shape = 'u32[144,128]{1,0:T(1,128)}', space=vmem, size = 0x12000, scoped, tag = 'internal scratch']
  #allocation2 [shape = 'f32[8,128]{1,0:T(8,128)}', space=vmem, size = 0x1000, scoped, tag = 'scratch operand']
  %s0 = inlined_call_operand.vmem [shape: f32[16,128], index: 0, kind: input, shape index: {}]
  %s1 = inlined_call_operand.vmem [shape: f32[32,128], index: 1, kind: input, shape index: {}]
  %s2 = inlined_call_operand.vmem [shape: f32[8,128], index: 2, kind: input, shape index: {}]
  %s3 = inlined_call_operand.vmem [shape: f32[2,128], index: 3, kind: input, shape index: {}]
  %s4 = inlined_call_operand.vmem [shape: f32[16,1], index: 4, kind: input, shape index: {}]
  %s5 = inlined_call_operand.vmem [shape: f32[16,1], index: 5, kind: input, shape index: {}]
  %s6 = inlined_call_operand.vmem [shape: bf16[40,16], index: 6, kind: input, shape index: {}]
  %s7 = inlined_call_operand.vmem [shape: f32[40,1], index: 7, kind: input, shape index: {}]
  %s8 = inlined_call_operand.vmem [shape: bf16[32,32], index: 8, kind: input, shape index: {}]
  %s9 = inlined_call_operand.vmem [shape: f32[32,1], index: 9, kind: input, shape index: {}]
  %s10 = inlined_call_operand.vmem [shape: bf16[28,32], index: 10, kind: input, shape index: {}]
  %s11 = inlined_call_operand.vmem [shape: f32[28,1], index: 11, kind: input, shape index: {}]
  %s12 = inlined_call_operand.vmem [shape: bf16[16,32], index: 12, kind: input, shape index: {}]
  %s13 = inlined_call_operand.vmem [shape: f32[16,1], index: 13, kind: input, shape index: {}]
  %s14 = inlined_call_operand.vmem [shape: bf16[16,8], index: 14, kind: input, shape index: {}]
  %s15 = inlined_call_operand.vmem [shape: f32[16,1], index: 15, kind: input, shape index: {}]
  %s16 = inlined_call_operand.vmem [shape: bf16[32,16], index: 16, kind: input, shape index: {}]
  %s17 = inlined_call_operand.vmem [shape: f32[32,1], index: 17, kind: input, shape index: {}]
  %s18 = inlined_call_operand.vmem [shape: f32[8,1], index: 18, kind: input, shape index: {}]
  %s19 = inlined_call_operand.vmem [shape: f32[8,1], index: 19, kind: input, shape index: {}]
  %s20 = inlined_call_operand.vmem [shape: f32[32,128], index: 20, kind: output, shape index: {0}]
  %s21 = inlined_call_operand.vmem [shape: f32[32,128], index: 21, kind: output, shape index: {1}]
  %s22 = inlined_call_operand.vmem [shape: f32[8,128], index: 22, kind: output, shape index: {2}]
  %s23 = inlined_call_operand.vmem [shape: f32[2,128], index: 23, kind: output, shape index: {3}]
  %24 = xla_tuple %s20, %s21, %s22, %s23
  %s25 = sld [smem:[#allocation0]]
  $region114: #{_tgn_mlstm_step.1} parent=0
    _
  %s27 = ssub.s32 1, %s25
  %s28 = scalar_select 0, %s27, %s25
  // Predicated region
  $region2: #{_tgn_mlstm_step.1} parent=0 // pred_check
    _
  $region3: #{_tgn_mlstm_step.1} parent=0 // pred_check_branch
    %30 = sbr.rel (0) target = $region5
  $region4: #{_tgn_mlstm_step.1} parent=0 // pred_region
    _
  $region5: #{_tgn_mlstm_step.1} parent=0 // pred_fallthru
    _
  // Predicated region
  $region6: #{_tgn_mlstm_step.1} parent=0 // pred_check
    _
  $region7: #{_tgn_mlstm_step.1} parent=0 // pred_check_branch
    %32 = sbr.rel (0) target = $region9
  $region8: #{_tgn_mlstm_step.1} parent=0 // pred_region
    _
  $region9: #{_tgn_mlstm_step.1} parent=0 // pred_fallthru
    _
  // Predicated region
  $region10: #{_tgn_mlstm_step.1} parent=0 // pred_check
    _
  $region11: #{_tgn_mlstm_step.1} parent=0 // pred_check_branch
    %34 = sbr.rel (0) target = $region13
  $region12: #{_tgn_mlstm_step.1} parent=0 // pred_region
    _
  $region13: #{_tgn_mlstm_step.1} parent=0 // pred_fallthru
    _
  // Predicated region
  $region14: #{_tgn_mlstm_step.1} parent=0 // pred_check
    _
  $region15: #{_tgn_mlstm_step.1} parent=0 // pred_check_branch
    %36 = sbr.rel (0) target = $region17
  $region16: #{_tgn_mlstm_step.1} parent=0 // pred_region
    _
  $region17: #{_tgn_mlstm_step.1} parent=0 // pred_fallthru
    _
  // Predicated region
  $region18: #{_tgn_mlstm_step.1} parent=0 // pred_check
    _
  $region19: #{_tgn_mlstm_step.1} parent=0 // pred_check_branch
    %38 = sbr.rel (0) target = $region21
  $region20: #{_tgn_mlstm_step.1} parent=0 // pred_region
    _
  $region21: #{_tgn_mlstm_step.1} parent=0 // pred_fallthru
    _
  // Predicated region
  $region22: #{_tgn_mlstm_step.1} parent=0 // pred_check
    _
  $region23: #{_tgn_mlstm_step.1} parent=0 // pred_check_branch
    %40 = sbr.rel (0) target = $region25
  $region24: #{_tgn_mlstm_step.1} parent=0 // pred_region
    _
  $region25: #{_tgn_mlstm_step.1} parent=0 // pred_fallthru
    _
  // Predicated region
  $region26: #{_tgn_mlstm_step.1} parent=0 // pred_check
    _
  $region27: #{_tgn_mlstm_step.1} parent=0 // pred_check_branch
    %42 = sbr.rel (0) target = $region29
  $region28: #{_tgn_mlstm_step.1} parent=0 // pred_region
    _
  $region29: #{_tgn_mlstm_step.1} parent=0 // pred_fallthru
    _
  // Predicated region
  $region30: #{_tgn_mlstm_step.1} parent=0 // pred_check
    _
  $region31: #{_tgn_mlstm_step.1} parent=0 // pred_check_branch
    %44 = sbr.rel (0) target = $region33
  $region32: #{_tgn_mlstm_step.1} parent=0 // pred_region
    _
  $region33: #{_tgn_mlstm_step.1} parent=0 // pred_fallthru
    _
  // Predicated region
  $region34: #{_tgn_mlstm_step.1} parent=0 // pred_check
    _
  $region35: #{_tgn_mlstm_step.1} parent=0 // pred_check_branch
    %46 = sbr.rel (0) target = $region37
  $region36: #{_tgn_mlstm_step.1} parent=0 // pred_region
    _
  $region37: #{_tgn_mlstm_step.1} parent=0 // pred_fallthru
    _
  // Predicated region
  $region38: #{_tgn_mlstm_step.1} parent=0 // pred_check
    _
  $region39: #{_tgn_mlstm_step.1} parent=0 // pred_check_branch
    %48 = sbr.rel (0) target = $region41
  $region40: #{_tgn_mlstm_step.1} parent=0 // pred_region
    _
  $region41: #{_tgn_mlstm_step.1} parent=0 // pred_fallthru
    _
  // Predicated region
  $region42: #{_tgn_mlstm_step.1} parent=0 // pred_check
    _
  $region43: #{_tgn_mlstm_step.1} parent=0 // pred_check_branch
    %50 = sbr.rel (0) target = $region45
  $region44: #{_tgn_mlstm_step.1} parent=0 // pred_region
    _
  $region45: #{_tgn_mlstm_step.1} parent=0 // pred_fallthru
    _
  // Predicated region
  $region46: #{_tgn_mlstm_step.1} parent=0 // pred_check
    _
  $region47: #{_tgn_mlstm_step.1} parent=0 // pred_check_branch
    %52 = sbr.rel (0) target = $region49
  $region48: #{_tgn_mlstm_step.1} parent=0 // pred_region
    _
  $region49: #{_tgn_mlstm_step.1} parent=0 // pred_fallthru
    _
  // Predicated region
  $region50: #{_tgn_mlstm_step.1} parent=0 // pred_check
    _
  $region51: #{_tgn_mlstm_step.1} parent=0 // pred_check_branch
    %54 = sbr.rel (0) target = $region53
  $region52: #{_tgn_mlstm_step.1} parent=0 // pred_region
    _
  $region53: #{_tgn_mlstm_step.1} parent=0 // pred_fallthru
    _
  // Predicated region
  $region54: #{_tgn_mlstm_step.1} parent=0 // pred_check
    _
  $region55: #{_tgn_mlstm_step.1} parent=0 // pred_check_branch
    %56 = sbr.rel (0) target = $region57
  $region56: #{_tgn_mlstm_step.1} parent=0 // pred_region
    _
  $region57: #{_tgn_mlstm_step.1} parent=0 // pred_fallthru
    _
  // Predicated region
  $region58: #{_tgn_mlstm_step.1} parent=0 // pred_check
    _
  $region59: #{_tgn_mlstm_step.1} parent=0 // pred_check_branch
    %58 = sbr.rel (0) target = $region61
  $region60: #{_tgn_mlstm_step.1} parent=0 // pred_region
    _
  $region61: #{_tgn_mlstm_step.1} parent=0 // pred_fallthru
    _
  // Predicated region
  $region62: #{_tgn_mlstm_step.1} parent=0 // pred_check
    _
  $region63: #{_tgn_mlstm_step.1} parent=0 // pred_check_branch
    %60 = sbr.rel (0) target = $region65
  $region64: #{_tgn_mlstm_step.1} parent=0 // pred_region
    _
  $region65: #{_tgn_mlstm_step.1} parent=0 // pred_fallthru
    _
  // Predicated region
  $region66: #{_tgn_mlstm_step.1} parent=0 // pred_check
    _
  $region67: #{_tgn_mlstm_step.1} parent=0 // pred_check_branch
    %62 = sbr.rel (0) target = $region69
  $region68: #{_tgn_mlstm_step.1} parent=0 // pred_region
    _
  $region69: #{_tgn_mlstm_step.1} parent=0 // pred_fallthru
    _
  // Predicated region
  $region70: #{_tgn_mlstm_step.1} parent=0 // pred_check
    _
  $region71: #{_tgn_mlstm_step.1} parent=0 // pred_check_branch
    %64 = sbr.rel (0) target = $region73
  $region72: #{_tgn_mlstm_step.1} parent=0 // pred_region
    _
  $region73: #{_tgn_mlstm_step.1} parent=0 // pred_fallthru
    _
  // Predicated region
  $region74: #{_tgn_mlstm_step.1} parent=0 // pred_check
    _
  $region75: #{_tgn_mlstm_step.1} parent=0 // pred_check_branch
    %66 = sbr.rel (0) target = $region77
  $region76: #{_tgn_mlstm_step.1} parent=0 // pred_region
    _
  $region77: #{_tgn_mlstm_step.1} parent=0 // pred_fallthru
    _
  // Predicated region
  $region78: #{_tgn_mlstm_step.1} parent=0 // pred_check
    _
  $region79: #{_tgn_mlstm_step.1} parent=0 // pred_check_branch
    %68 = sbr.rel (0) target = $region81
  $region80: #{_tgn_mlstm_step.1} parent=0 // pred_region
    _
  $region81: #{_tgn_mlstm_step.1} parent=0 // pred_fallthru
    _
  %v70 = vld [vmem:[%s0] sm:$0xff]
  %v71 = vld [vmem:[%s0 + $0x8] sm:$0xff]
  %v72 = vadd.f32 %v70, %v71
  %v73 = vrot.slane %v72, 4
  %v74 = vadd.f32 %v72, %v73
  %v75 = vrot.slane %v74, 2
  %v76 = vadd.f32 %v74, %v75
  %v77 = vrot.slane %v76, 1
  %v78 = vadd.f32 %v76, %v77
  %v79 = vrcp.pop 16.0
  %v80 = vmul.f32 %v78, %v79
  %v81 = vsub.f32 %v70, %v80
  %v82 = vsub.f32 %v71, %v80
  %v83 = vmul.f32 %v81, %v81
  %v84 = vmul.f32 %v82, %v82
  %v85 = vadd.f32 %v83, %v84
  %v86 = vrot.slane %v85, 4
  %v87 = vadd.f32 %v85, %v86
  %v88 = vrot.slane %v87, 2
  %v89 = vadd.f32 %v87, %v88
  %v90 = vrot.slane %v89, 1
  %v91 = vadd.f32 %v89, %v90
  %v92 = vmul.f32 %v91, %v79
  %v93 = vadd.f32 %v92, 1e-05
  %v94 = vrsqrt.pop %v93
  %v95 = vmul.f32 %v81, %v94
  %v96 = vmul.f32 %v82, %v94
  %v97 = vld [vmem:[%s4] sm:$0xff]
  %v98 = vld [vmem:[%s4 + $0x8] sm:$0xff]
  %100 = vset.pattern.permute.xlu0 0
  %101 = vperm.xlu0 %100, %v97
  %v102 = vpop.permute.xlu0 %101
  %105 = vset.pattern.permute.xlu0 0
  %106 = vperm.xlu0 %105, %v98
  %v107 = vpop.permute.xlu0 %106
  %v109 = vmul.f32 %v95, %v102
  %v110 = vmul.f32 %v96, %v107
  %v111 = vld [vmem:[%s5] sm:$0xff]
  %v112 = vld [vmem:[%s5 + $0x8] sm:$0xff]
  %114 = vset.pattern.permute.xlu0 0
  %115 = vperm.xlu0 %114, %v111
  %v116 = vpop.permute.xlu0 %115
  %119 = vset.pattern.permute.xlu0 0
  %120 = vperm.xlu0 %119, %v112
  %v121 = vpop.permute.xlu0 %120
  %v123 = vadd.f32 %v109, %v116
  %v124 = vadd.f32 %v110, %v121
  %v125 = vld [vmem:[%s6] sm:$0xf]
  %v126 = vld [vmem:[%s6 + $0x4] sm:$0xf]
  %v127 = vld [vmem:[%s6 + $0x8] sm:$0xf]
  %v128 = vld [vmem:[%s6 + $0xc] sm:$0xf]
  %v129 = vld [vmem:[%s6 + $0x10] sm:$0xf]
  %v130 = vpack.c.bf16 %v124, %v123
  %v131 = vld [vmem:[%s7] sm:$0xff]
  %v132 = vld [vmem:[%s7 + $0x8] sm:$0xff]
  %v133 = vld [vmem:[%s7 + $0x10] sm:$0xff]
  %v134 = vld [vmem:[%s7 + $0x18] sm:$0xff]
  %v135 = vld [vmem:[%s7 + $0x20] sm:$0xff]
  %137 = vset.pattern.permute.xlu0 0
  %138 = vperm.xlu0 %137, %v131
  %v139 = vpop.permute.xlu0 %138
  %142 = vset.pattern.permute.xlu0 0
  %143 = vperm.xlu0 %142, %v132
  %v144 = vpop.permute.xlu0 %143
  %147 = vset.pattern.permute.xlu0 0
  %148 = vperm.xlu0 %147, %v133
  %v149 = vpop.permute.xlu0 %148
  %152 = vset.pattern.permute.xlu0 0
  %153 = vperm.xlu0 %152, %v134
  %v154 = vpop.permute.xlu0 %153
  %157 = vset.pattern.permute.xlu0 0
  %158 = vperm.xlu0 %157, %v135
  %v159 = vpop.permute.xlu0 %158
  %v166 = vunpack.c.l.b16 %v125
  %v167 = vunpack.c.l.b16 %v126
  %v168 = vunpack.c.l.b16 %v127
  %v169 = vunpack.c.l.b16 %v128
  %v170 = vunpack.c.l.b16 %v129
  %v171 = vpack.c.b16 %v167, %v166
  %v172 = vpack.c.b16 %v169, %v168
  %v173 = vpack.c.b16 %v170, %v170
  %vm174 = vcmask 130048
  %v176 = vsel %vm174, %v171, 0
  %v179 = vsel %vm174, %v172, 0
  %v182 = vsel %vm174, %v173, 0
  %184 = vmatprep.subr.bf16.mxu0 0
  %185 = vmatpush1.bf16.msra.mxu0 %v130
  %186 = vmatprep.subr.bf16.mxu0 0
  %187 = vmatpush1.bf16.msra.mxu0 0
  %188 = vmatprep.subr.bf16.mxu0 0
  %189 = vmatpush1.bf16.msra.mxu0 0
  %190 = vmatprep.subr.bf16.mxu0 0
  %191 = vmatpush1.bf16.msra.mxu0 0
  %192 = vmatprep.subr.bf16.mxu0 0
  %193 = vmatpush1.bf16.msra.mxu0 0
  %194 = vmatprep.subr.bf16.mxu0 0
  %195 = vmatpush1.bf16.msra.mxu0 0
  %196 = vmatprep.subr.bf16.mxu0 0
  %197 = vmatpush1.bf16.msra.mxu0 0
  %198 = vmatprep.subr.bf16.mxu0 0
  %199 = vmatpush1.bf16.msra.mxu0 0
  %200 = vmatprep.subr.bf16.mxu0 0
  %201 = vmatpush1.bf16.msra.mxu0 0
  %202 = vmatprep.subr.bf16.mxu0 0
  %203 = vmatpush1.bf16.msra.mxu0 0
  %204 = vmatprep.subr.bf16.mxu0 0
  %205 = vmatpush1.bf16.msra.mxu0 0
  %206 = vmatprep.subr.bf16.mxu0 0
  %207 = vmatpush1.bf16.msra.mxu0 0
  %208 = vmatprep.subr.bf16.mxu0 0
  %209 = vmatpush1.bf16.msra.mxu0 0
  %210 = vmatprep.subr.bf16.mxu0 0
  %211 = vmatpush1.bf16.msra.mxu0 0
  %212 = vmatprep.subr.bf16.mxu0 0
  %213 = vmatpush1.bf16.msra.mxu0 0
  %214 = vmatprep.subr.bf16.mxu0 0
  %215 = vmatpush1.bf16.msra.mxu0 0
  %216 = vmatprep.mubr.bf16.mxu0 0
  %217 = vmatmul.mubr.bf16.gmra.mrb[0].mxu0 %v176
  %v218 = vpop.f32.mrb[0].mxu0
  %v219 = vadd.f32 %v139, %v218
  %v220 = vpop.f32.mrb[0].mxu0
  %v221 = vpop.f32.mrb[0].mxu0
  %v222 = vadd.f32 %v144, %v221
  %v223 = vpop.f32.mrb[0].mxu0
  %224 = vmatprep.mubr.bf16.mxu0 0
  %225 = vmatmul.mubr.bf16.gmra.mrb[0].mxu0 %v179
  %v226 = vpop.f32.mrb[0].mxu0
  %v227 = vadd.f32 %v149, %v226
  %v228 = vpop.f32.mrb[0].mxu0
  %v229 = vpop.f32.mrb[0].mxu0
  %v230 = vadd.f32 %v154, %v229
  %v231 = vpop.f32.mrb[0].mxu0
  %232 = vmatprep.mubr.bf16.mxu0 0
  %233 = vmatmul.mubr.bf16.gmra.mrb[0].mxu0 %v182
  %v234 = vpop.f32.mrb[0].mxu0
  %v235 = vadd.f32 %v159, %v234
  %v236 = vpop.f32.mrb[0].mxu0
  %v237 = vpop.f32.mrb[0].mxu0
  %v238 = vpop.f32.mrb[0].mxu0
  %239 = vdwg.mxu0
  %v240 = vld [vmem:[%s8] sm:$0xf]
  %v241 = vld [vmem:[%s8 + $0x4] sm:$0xf]
  %v242 = vld [vmem:[%s8 + $0x8] sm:$0xf]
  %v243 = vld [vmem:[%s8 + $0xc] sm:$0xf]
  %v244 = vpack.c.bf16 %v222, %v219
  %v245 = vpack.c.bf16 %v230, %v227
  %v246 = vld [vmem:[%s9] sm:$0xff]
  %v247 = vld [vmem:[%s9 + $0x8] sm:$0xff]
  %v248 = vld [vmem:[%s9 + $0x10] sm:$0xff]
  %v249 = vld [vmem:[%s9 + $0x18] sm:$0xff]
  %251 = vset.pattern.permute.xlu0 0
  %252 = vperm.xlu0 %251, %v246
  %v253 = vpop.permute.xlu0 %252
  %256 = vset.pattern.permute.xlu0 0
  %257 = vperm.xlu0 %256, %v247
  %v258 = vpop.permute.xlu0 %257
  %261 = vset.pattern.permute.xlu0 0
  %262 = vperm.xlu0 %261, %v248
  %v263 = vpop.permute.xlu0 %262
  %266 = vset.pattern.permute.xlu0 0
  %267 = vperm.xlu0 %266, %v249
  %v268 = vpop.permute.xlu0 %267
  %v274 = vunpack.c.l.b16 %v240
  %v275 = vunpack.c.l.b16 %v241
  %v276 = vunpack.c.l.b16 %v242
  %v277 = vunpack.c.l.b16 %v243
  %v278 = vpack.c.b16 %v275, %v274
  %v279 = vpack.c.b16 %v277, %v276
  %vm280 = vcmask 261120
  %v282 = vsel %vm280, %v278, 0
  %v285 = vsel %vm280, %v279, 0
  %287 = vmatprep.subr.bf16.mxu0 0
  %288 = vmatpush1.bf16.msra.mxu0 %v244
  %289 = vmatprep.subr.bf16.mxu0 0
  %290 = vmatpush1.bf16.msra.mxu0 %v245
  %291 = vmatprep.subr.bf16.mxu0 0
  %292 = vmatpush1.bf16.msra.mxu0 0
  %293 = vmatprep.subr.bf16.mxu0 0
  %294 = vmatpush1.bf16.msra.mxu0 0
  %295 = vmatprep.subr.bf16.mxu0 0
  %296 = vmatpush1.bf16.msra.mxu0 0
  %297 = vmatprep.subr.bf16.mxu0 0
  %298 = vmatpush1.bf16.msra.mxu0 0
  %299 = vmatprep.subr.bf16.mxu0 0
  %300 = vmatpush1.bf16.msra.mxu0 0
  %301 = vmatprep.subr.bf16.mxu0 0
  %302 = vmatpush1.bf16.msra.mxu0 0
  %303 = vmatprep.subr.bf16.mxu0 0
  %304 = vmatpush1.bf16.msra.mxu0 0
  %305 = vmatprep.subr.bf16.mxu0 0
  %306 = vmatpush1.bf16.msra.mxu0 0
  %307 = vmatprep.subr.bf16.mxu0 0
  %308 = vmatpush1.bf16.msra.mxu0 0
  %309 = vmatprep.subr.bf16.mxu0 0
  %310 = vmatpush1.bf16.msra.mxu0 0
  %311 = vmatprep.subr.bf16.mxu0 0
  %312 = vmatpush1.bf16.msra.mxu0 0
  %313 = vmatprep.subr.bf16.mxu0 0
  %314 = vmatpush1.bf16.msra.mxu0 0
  %315 = vmatprep.subr.bf16.mxu0 0
  %316 = vmatpush1.bf16.msra.mxu0 0
  %317 = vmatprep.subr.bf16.mxu0 0
  %318 = vmatpush1.bf16.msra.mxu0 0
  %319 = vmatprep.mubr.bf16.mxu0 0
  %320 = vmatmul.mubr.bf16.gmra.mrb[0].mxu0 %v282
  %v321 = vpop.f32.mrb[0].mxu0
  %v322 = vadd.f32 %v253, %v321
  %v323 = vpop.f32.mrb[0].mxu0
  %v324 = vpop.f32.mrb[0].mxu0
  %v325 = vadd.f32 %v258, %v324
  %v326 = vpop.f32.mrb[0].mxu0
  %327 = vmatprep.mubr.bf16.mxu0 0
  %328 = vmatmul.mubr.bf16.gmra.mrb[0].mxu0 %v285
  %v329 = vpop.f32.mrb[0].mxu0
  %v330 = vadd.f32 %v263, %v329
  %v331 = vpop.f32.mrb[0].mxu0
  %v332 = vpop.f32.mrb[0].mxu0
  %v333 = vadd.f32 %v268, %v332
  %v334 = vpop.f32.mrb[0].mxu0
  %335 = vdwg.mxu0
  %v336 = vxor.u32 %v322, 2147483648
  %v337 = vxor.u32 %v325, 2147483648
  %v338 = vxor.u32 %v330, 2147483648
  %v339 = vxor.u32 %v333, 2147483648
  %v340 = vmul.f32 %v336, 1.442695
  %v341 = vpow.pop %v340
  %v342 = vmul.f32 %v337, 1.442695
  %v343 = vpow.pop %v342
  %v344 = vmul.f32 %v338, 1.442695
  %v345 = vpow.pop %v344
  %v346 = vmul.f32 %v339, 1.442695
  %v347 = vpow.pop %v346
  %v348 = vadd.f32 %v341, 1.0
  %v349 = vadd.f32 %v343, 1.0
  %v350 = vadd.f32 %v345, 1.0
  %v351 = vadd.f32 %v347, 1.0
  %v352 = vrcp.pop %v348
  %v353 = vmul.f32 1.0, %v352
  %v354 = vrcp.pop %v349
  %v355 = vmul.f32 1.0, %v354
  %v356 = vrcp.pop %v350
  %v357 = vmul.f32 1.0, %v356
  %v358 = vrcp.pop %v351
  %v359 = vmul.f32 1.0, %v358
  %v360 = vmul.f32 %v322, %v353
  %v361 = vmul.f32 %v325, %v355
  %v362 = vmul.f32 %v330, %v357
  %v363 = vmul.f32 %v333, %v359
  %v364 = vld [vmem:[%s10] sm:$0xf]
  %v365 = vld [vmem:[%s10 + $0x4] sm:$0xf]
  %v366 = vld [vmem:[%s10 + $0x8] sm:$0xf]
  %v367 = vld [vmem:[%s10 + $0xc] sm:$0x3]
  %v368 = vpack.c.bf16 %v361, %v360
  %v369 = vpack.c.bf16 %v363, %v362
  %v370 = vld [vmem:[%s11] sm:$0xff]
  %v371 = vld [vmem:[%s11 + $0x8] sm:$0xff]
  %v372 = vld [vmem:[%s11 + $0x10] sm:$0xff]
  %v373 = vld [vmem:[%s11 + $0x18] sm:$0xf]
  %375 = vset.pattern.permute.xlu0 0
  %376 = vperm.xlu0 %375, %v370
  %v377 = vpop.permute.xlu0 %376
  %380 = vset.pattern.permute.xlu0 0
  %381 = vperm.xlu0 %380, %v371
  %v382 = vpop.permute.xlu0 %381
  %385 = vset.pattern.permute.xlu0 0
  %386 = vperm.xlu0 %385, %v372
  %v387 = vpop.permute.xlu0 %386
  %390 = vset.pattern.permute.xlu0 0
  %391 = vperm.xlu0 %390, %v373
  %v392 = vpop.permute.xlu0 %391
  %v398 = vunpack.c.l.b16 %v364
  %v399 = vunpack.c.l.b16 %v365
  %v400 = vunpack.c.l.b16 %v366
  %v401 = vunpack.c.l.b16 %v367
  %v402 = vpack.c.b16 %v399, %v398
  %v403 = vpack.c.b16 %v401, %v400
  %v405 = vsel %vm280, %v402, 0
  %v408 = vsel %vm280, %v403, 0
  %410 = vmatprep.subr.bf16.mxu0 0
  %411 = vmatpush1.bf16.msra.mxu0 %v368
  %412 = vmatprep.subr.bf16.mxu0 0
  %413 = vmatpush1.bf16.msra.mxu0 %v369
  %414 = vmatprep.subr.bf16.mxu0 0
  %415 = vmatpush1.bf16.msra.mxu0 0
  %416 = vmatprep.subr.bf16.mxu0 0
  %417 = vmatpush1.bf16.msra.mxu0 0
  %418 = vmatprep.subr.bf16.mxu0 0
  %419 = vmatpush1.bf16.msra.mxu0 0
  %420 = vmatprep.subr.bf16.mxu0 0
  %421 = vmatpush1.bf16.msra.mxu0 0
  %422 = vmatprep.subr.bf16.mxu0 0
  %423 = vmatpush1.bf16.msra.mxu0 0
  %424 = vmatprep.subr.bf16.mxu0 0
  %425 = vmatpush1.bf16.msra.mxu0 0
  %426 = vmatprep.subr.bf16.mxu0 0
  %427 = vmatpush1.bf16.msra.mxu0 0
  %428 = vmatprep.subr.bf16.mxu0 0
  %429 = vmatpush1.bf16.msra.mxu0 0
  %430 = vmatprep.subr.bf16.mxu0 0
  %431 = vmatpush1.bf16.msra.mxu0 0
  %432 = vmatprep.subr.bf16.mxu0 0
  %433 = vmatpush1.bf16.msra.mxu0 0
  %434 = vmatprep.subr.bf16.mxu0 0
  %435 = vmatpush1.bf16.msra.mxu0 0
  %436 = vmatprep.subr.bf16.mxu0 0
  %437 = vmatpush1.bf16.msra.mxu0 0
  %438 = vmatprep.subr.bf16.mxu0 0
  %439 = vmatpush1.bf16.msra.mxu0 0
  %440 = vmatprep.subr.bf16.mxu0 0
  %441 = vmatpush1.bf16.msra.mxu0 0
  %442 = vmatprep.mubr.bf16.mxu0 0
  %443 = vmatmul.mubr.bf16.gmra.mrb[0].mxu0 %v405
  %v444 = vpop.f32.mrb[0].mxu0
  %v445 = vadd.f32 %v377, %v444
  %v446 = vpop.f32.mrb[0].mxu0
  %v447 = vpop.f32.mrb[0].mxu0
  %v448 = vadd.f32 %v382, %v447
  %v449 = vpop.f32.mrb[0].mxu0
  %450 = vmatprep.mubr.bf16.mxu0 0
  %451 = vmatmul.mubr.bf16.gmra.mrb[0].mxu0 %v408
  %v452 = vpop.f32.mrb[0].mxu0
  %v453 = vadd.f32 %v387, %v452
  %v454 = vpop.f32.mrb[0].mxu0
  %v455 = vpop.f32.mrb[0].mxu0
  %v456 = vadd.f32 %v392, %v455
  %v457 = vpop.f32.mrb[0].mxu0
  %458 = vdwg.mxu0
  %v459 = vmul.f32 %v448, 0.5
  %v460 = vld [vmem:[%s12] sm:$0xf]
  %v461 = vld [vmem:[%s12 + $0x4] sm:$0xf]
  %v462 = vld [vmem:[%s13] sm:$0xff]
  %v463 = vld [vmem:[%s13 + $0x8] sm:$0xff]
  %465 = vset.pattern.permute.xlu0 0
  %466 = vperm.xlu0 %465, %v462
  %v467 = vpop.permute.xlu0 %466
  %470 = vset.pattern.permute.xlu0 0
  %471 = vperm.xlu0 %470, %v463
  %v472 = vpop.permute.xlu0 %471
  %v476 = vunpack.c.l.b16 %v460
  %v477 = vunpack.c.l.b16 %v461
  %v478 = vpack.c.b16 %v477, %v476
  %v480 = vsel %vm280, %v478, 0
  %482 = vmatprep.subr.bf16.mxu0 0
  %483 = vmatpush1.bf16.msra.mxu0 %v244
  %484 = vmatprep.subr.bf16.mxu0 0
  %485 = vmatpush1.bf16.msra.mxu0 %v245
  %486 = vmatprep.subr.bf16.mxu0 0
  %487 = vmatpush1.bf16.msra.mxu0 0
  %488 = vmatprep.subr.bf16.mxu0 0
  %489 = vmatpush1.bf16.msra.mxu0 0
  %490 = vmatprep.subr.bf16.mxu0 0
  %491 = vmatpush1.bf16.msra.mxu0 0
  %492 = vmatprep.subr.bf16.mxu0 0
  %493 = vmatpush1.bf16.msra.mxu0 0
  %494 = vmatprep.subr.bf16.mxu0 0
  %495 = vmatpush1.bf16.msra.mxu0 0
  %496 = vmatprep.subr.bf16.mxu0 0
  %497 = vmatpush1.bf16.msra.mxu0 0
  %498 = vmatprep.subr.bf16.mxu0 0
  %499 = vmatpush1.bf16.msra.mxu0 0
  %500 = vmatprep.subr.bf16.mxu0 0
  %501 = vmatpush1.bf16.msra.mxu0 0
  %502 = vmatprep.subr.bf16.mxu0 0
  %503 = vmatpush1.bf16.msra.mxu0 0
  %504 = vmatprep.subr.bf16.mxu0 0
  %505 = vmatpush1.bf16.msra.mxu0 0
  %506 = vmatprep.subr.bf16.mxu0 0
  %507 = vmatpush1.bf16.msra.mxu0 0
  %508 = vmatprep.subr.bf16.mxu0 0
  %509 = vmatpush1.bf16.msra.mxu0 0
  %510 = vmatprep.subr.bf16.mxu0 0
  %511 = vmatpush1.bf16.msra.mxu0 0
  %512 = vmatprep.subr.bf16.mxu0 0
  %513 = vmatpush1.bf16.msra.mxu0 0
  %514 = vmatprep.mubr.bf16.mxu0 0
  %515 = vmatmul.mubr.bf16.gmra.mrb[0].mxu0 %v480
  %v516 = vpop.f32.mrb[0].mxu0
  %v517 = vadd.f32 %v467, %v516
  %v518 = vpop.f32.mrb[0].mxu0
  %v519 = vpop.f32.mrb[0].mxu0
  %v520 = vadd.f32 %v472, %v519
  %v521 = vpop.f32.mrb[0].mxu0
  %522 = vdwg.mxu0
  %v523 = vxor.u32 %v520, 2147483648
  %v524 = vmul.f32 %v523, 1.442695
  %v525 = vpow.pop %v524
  %v526 = vadd.f32 %v525, 1.0
  %v527 = vrcp.pop %v526
  %v528 = vmul.f32 1.0, %v527
  %v529 = vld [vmem:[%s3] sm:$0x3]
  %v531 = vrot.slane %v529, 6
  %v533 = vadd.f32 %v456, %v531
  %v535 = vrot.slane %v456, 6
  %v537 = vmax.f32 %v533, %v535
  %v539 = vrot.slane %v537, 2
  %v541 = vsub.f32 %v456, %v539
  %v542 = vmul.f32 %v541, 1.442695
  %v543 = vpow.pop %v542
  %v544 = vsub.f32 %v456, %v537
  %v545 = vadd.f32 %v544, %v531
  %v546 = vmul.f32 %v545, 1.442695
  %v547 = vpow.pop %v546
  %548 = vst [vmem:[%s23 - $0x2] sm:$0xc] %v537
  %v549 = vld [vmem:[%s18] sm:$0xff]
  %v550 = vld [vmem:[%s19] sm:$0xff]
  %v551 = vld [vmem:[%s2] sm:$0xf]
  %v552 = vlaneseq
  %v553 = vshrl.u32 %v552, 7
  %v554 = vsub.s32 2, %v553
  %v555 = vrot.slane %v547, %v554
  %v556 = vmul.f32 %v555, %v551
  %v557 = vlaneseq
  %v558 = vshrl.u32 %v557, 7
  %v559 = vsub.s32 0, %v558
  %v560 = vrot.slane %v543, %v559
  %v561 = vmul.f32 %v560, %v459
  %v562 = vadd.f32 %v556, %v561
  %563 = vst [vmem:[%s22] sm:$0xf] %v562
  %v564 = vmul.f32 %v562, %v445
  %vm565 = vcmask 1043456
  %v566 = vsel %vm565, %v564, 0.0
  %v567 = vrot.slane %v566, 4
  %v568 = vadd.f32 %v566, %v567
  %v569 = vrot.slane %v568, 2
  %v570 = vadd.f32 %v568, %v569
  %v571 = vrot.slane %v570, 1
  %v572 = vadd.f32 %v570, %v571
  %v573 = vmax.f32 %v572, 1.0
  %v574 = vrcp.pop %v573
  %v575 = vld [vmem:[%s1] sm:$0xf]
  %v576 = vmul.f32 %v555, %v575
  %v577 = vmul.f32 %v543, %v517
  %v578 = vlaneseq
  %v579 = vshrl.u32 %v578, 7
  %v580 = vsub.s32 0, %v579
  %v581 = vrot.slane %v577, %v580
  %v582 = vmul.f32 %v581, %v459
  %v583 = vadd.f32 %v576, %v582
  %584 = vst [vmem:[%s21] sm:$0xf] %v583
  %v585 = vmul.f32 %v583, %v445
  %v586 = vsel %vm565, %v585, 0.0
  %v587 = vrot.slane %v586, 4
  %v588 = vadd.f32 %v586, %v587
  %v589 = vrot.slane %v588, 2
  %v590 = vadd.f32 %v588, %v589
  %v591 = vrot.slane %v590, 1
  %v592 = vadd.f32 %v590, %v591
  %v593 = vmul.f32 %v528, %v592
  %v594 = vmul.f32 %v593, %v574
  %595 = vst [vmem:[#allocation2] sm:$0x1] %v594
  %v596 = vld [vmem:[%s1 + $0x4] sm:$0xf]
  %v597 = vmul.f32 %v555, %v596
  %v599 = vrot.slane %v517, 1
  %v601 = vmul.f32 %v543, %v599
  %v602 = vlaneseq
  %v603 = vshrl.u32 %v602, 7
  %v604 = vsub.s32 0, %v603
  %v605 = vrot.slane %v601, %v604
  %v606 = vmul.f32 %v605, %v459
  %v607 = vadd.f32 %v597, %v606
  %608 = vst [vmem:[%s21 + $0x4] sm:$0xf] %v607
  %v609 = vmul.f32 %v607, %v445
  %v610 = vsel %vm565, %v609, 0.0
  %v611 = vrot.slane %v610, 4
  %v612 = vadd.f32 %v610, %v611
  %v613 = vrot.slane %v612, 2
  %v614 = vadd.f32 %v612, %v613
  %v615 = vrot.slane %v614, 1
  %v616 = vadd.f32 %v614, %v615
  %v617 = vmul.f32 %v528, %v616
  %v618 = vmul.f32 %v617, %v574
  %619 = vst [vmem:[#allocation2] sm:$0x2] %v618
  %v620 = vld [vmem:[%s1 + $0x8] sm:$0xf]
  %v621 = vmul.f32 %v555, %v620
  %v622 = vrot.slane %v517, 2
  %v624 = vmul.f32 %v543, %v622
  %v625 = vlaneseq
  %v626 = vshrl.u32 %v625, 7
  %v627 = vsub.s32 0, %v626
  %v628 = vrot.slane %v624, %v627
  %v629 = vmul.f32 %v628, %v459
  %v630 = vadd.f32 %v621, %v629
  %631 = vst [vmem:[%s21 + $0x8] sm:$0xf] %v630
  %v632 = vmul.f32 %v630, %v445
  %v633 = vsel %vm565, %v632, 0.0
  %v634 = vrot.slane %v633, 4
  %v635 = vadd.f32 %v633, %v634
  %v636 = vrot.slane %v635, 2
  %v637 = vadd.f32 %v635, %v636
  %v638 = vrot.slane %v637, 1
  %v639 = vadd.f32 %v637, %v638
  %v640 = vmul.f32 %v528, %v639
  %v641 = vmul.f32 %v640, %v574
  %642 = vst [vmem:[#allocation2] sm:$0x4] %v641
  %v643 = vld [vmem:[%s1 + $0xc] sm:$0xf]
  %v644 = vmul.f32 %v555, %v643
  %v645 = vrot.slane %v517, 3
  %v647 = vmul.f32 %v543, %v645
  %v648 = vlaneseq
  %v649 = vshrl.u32 %v648, 7
  %v650 = vsub.s32 0, %v649
  %v651 = vrot.slane %v647, %v650
  %v652 = vmul.f32 %v651, %v459
  %v653 = vadd.f32 %v644, %v652
  %654 = vst [vmem:[%s21 + $0xc] sm:$0xf] %v653
  %v655 = vmul.f32 %v653, %v445
  %v656 = vsel %vm565, %v655, 0.0
  %v657 = vrot.slane %v656, 4
  %v658 = vadd.f32 %v656, %v657
  %v659 = vrot.slane %v658, 2
  %v660 = vadd.f32 %v658, %v659
  %v661 = vrot.slane %v660, 1
  %v662 = vadd.f32 %v660, %v661
  %v663 = vmul.f32 %v528, %v662
  %v664 = vmul.f32 %v663, %v574
  %665 = vst [vmem:[#allocation2] sm:$0x8] %v664
  %v666 = vld [vmem:[#allocation2] sm:$0xf]
  %v667 = vsel %vm565, %v666, 0.0
  %v668 = vrot.slane %v667, 4
  %v669 = vadd.f32 %v667, %v668
  %v670 = vrot.slane %v669, 2
  %v671 = vadd.f32 %v669, %v670
  %v672 = vrot.slane %v671, 1
  %v673 = vadd.f32 %v671, %v672
  %v674 = vrcp.pop 4.0
  %v675 = vmul.f32 %v673, %v674
  %v676 = vsub.f32 %v666, %v675
  %v677 = vmul.f32 %v676, %v676
  %v678 = vsel %vm565, %v677, 0.0
  %v679 = vrot.slane %v678, 4
  %v680 = vadd.f32 %v678, %v679
  %v681 = vrot.slane %v680, 2
  %v682 = vadd.f32 %v680, %v681
  %v683 = vrot.slane %v682, 1
  %v684 = vadd.f32 %v682, %v683
  %v685 = vmul.f32 %v684, %v674
  %v686 = vadd.f32 %v685, 1e-05
  %v687 = vrsqrt.pop %v686
  %v688 = vmul.f32 %v676, %v687
  %690 = vset.pattern.permute.xlu0 0
  %691 = vperm.xlu0 %690, %v549
  %v692 = vpop.permute.xlu0 %691
  %v694 = vmul.f32 %v688, %v692
  %696 = vset.pattern.permute.xlu0 0
  %697 = vperm.xlu0 %696, %v550
  %v698 = vpop.permute.xlu0 %697
  %v700 = vadd.f32 %v694, %v698
  %v701 = vadd.f32 %v700, %v453
  %702 = vst [vmem:[#allocation2] sm:$0xf] %v701
  %v703 = vld [vmem:[%s2 + $0x4] sm:$0xf]
  %v704 = vlaneseq
  %v705 = vshrl.u32 %v704, 7
  %v706 = vsub.s32 3, %v705
  %v707 = vrot.slane %v547, %v706
  %v708 = vmul.f32 %v707, %v703
  %v709 = vlaneseq
  %v710 = vshrl.u32 %v709, 7
  %v711 = vsub.s32 1, %v710
  %v712 = vrot.slane %v543, %v711
  %v713 = vmul.f32 %v712, %v459
  %v715 = vrot.slane %v713, 4
  %v717 = vadd.f32 %v708, %v715
  %718 = vst [vmem:[%s22 + $0x4] sm:$0xf] %v717
  %v720 = vrot.slane %v445, 4
  %v722 = vmul.f32 %v717, %v720
  %v723 = vsel %vm565, %v722, 0.0
  %v724 = vrot.slane %v723, 4
  %v725 = vadd.f32 %v723, %v724
  %v726 = vrot.slane %v725, 2
  %v727 = vadd.f32 %v725, %v726
  %v728 = vrot.slane %v727, 1
  %v729 = vadd.f32 %v727, %v728
  %v730 = vmax.f32 %v729, 1.0
  %v731 = vrcp.pop %v730
  %v732 = vld [vmem:[%s1 + $0x10] sm:$0xf]
  %v733 = vmul.f32 %v707, %v732
  %v734 = vlaneseq
  %v735 = vshrl.u32 %v734, 7
  %v736 = vsub.s32 1, %v735
  %v737 = vrot.slane %v647, %v736
  %v738 = vmul.f32 %v737, %v459
  %v740 = vrot.slane %v738, 4
  %v742 = vadd.f32 %v733, %v740
  %743 = vst [vmem:[%s21 + $0x10] sm:$0xf] %v742
  %v744 = vmul.f32 %v742, %v720
  %v745 = vsel %vm565, %v744, 0.0
  %v746 = vrot.slane %v745, 4
  %v747 = vadd.f32 %v745, %v746
  %v748 = vrot.slane %v747, 2
  %v749 = vadd.f32 %v747, %v748
  %v750 = vrot.slane %v749, 1
  %v751 = vadd.f32 %v749, %v750
  %v752 = vmul.f32 %v528, %v751
  %v753 = vmul.f32 %v752, %v731
  %754 = vst [vmem:[#allocation2] sm:$0x10] %v753
  %v755 = vld [vmem:[%s1 + $0x14] sm:$0xf]
  %v756 = vmul.f32 %v707, %v755
  %v757 = vrot.slane %v517, 4
  %v759 = vmul.f32 %v543, %v757
  %v760 = vlaneseq
  %v761 = vshrl.u32 %v760, 7
  %v762 = vsub.s32 1, %v761
  %v763 = vrot.slane %v759, %v762
  %v764 = vmul.f32 %v763, %v459
  %v766 = vrot.slane %v764, 4
  %v768 = vadd.f32 %v756, %v766
  %769 = vst [vmem:[%s21 + $0x14] sm:$0xf] %v768
  %v770 = vmul.f32 %v768, %v720
  %v771 = vsel %vm565, %v770, 0.0
  %v772 = vrot.slane %v771, 4
  %v773 = vadd.f32 %v771, %v772
  %v774 = vrot.slane %v773, 2
  %v775 = vadd.f32 %v773, %v774
  %v776 = vrot.slane %v775, 1
  %v777 = vadd.f32 %v775, %v776
  %v778 = vmul.f32 %v528, %v777
  %v779 = vmul.f32 %v778, %v731
  %780 = vst [vmem:[#allocation2] sm:$0x20] %v779
  %v781 = vld [vmem:[%s1 + $0x18] sm:$0xf]
  %v782 = vmul.f32 %v707, %v781
  %v783 = vrot.slane %v517, 5
  %v785 = vmul.f32 %v543, %v783
  %v786 = vlaneseq
  %v787 = vshrl.u32 %v786, 7
  %v788 = vsub.s32 1, %v787
  %v789 = vrot.slane %v785, %v788
  %v790 = vmul.f32 %v789, %v459
  %v792 = vrot.slane %v790, 4
  %v794 = vadd.f32 %v782, %v792
  %795 = vst [vmem:[%s21 + $0x18] sm:$0xf] %v794
  %v796 = vmul.f32 %v794, %v720
  %v797 = vsel %vm565, %v796, 0.0
  %v798 = vrot.slane %v797, 4
  %v799 = vadd.f32 %v797, %v798
  %v800 = vrot.slane %v799, 2
  %v801 = vadd.f32 %v799, %v800
  %v802 = vrot.slane %v801, 1
  %v803 = vadd.f32 %v801, %v802
  %v804 = vmul.f32 %v528, %v803
  %v805 = vmul.f32 %v804, %v731
  %806 = vst [vmem:[#allocation2] sm:$0x40] %v805
  %v807 = vld [vmem:[%s1 + $0x1c] sm:$0xf]
  %v808 = vmul.f32 %v707, %v807
  %v809 = vrot.slane %v517, 6
  %v811 = vmul.f32 %v543, %v809
  %v812 = vlaneseq
  %v813 = vshrl.u32 %v812, 7
  %v814 = vsub.s32 1, %v813
  %v815 = vrot.slane %v811, %v814
  %v816 = vmul.f32 %v815, %v459
  %v818 = vrot.slane %v816, 4
  %v820 = vadd.f32 %v808, %v818
  %821 = vst [vmem:[%s21 + $0x1c] sm:$0xf] %v820
  %v822 = vmul.f32 %v820, %v720
  %v823 = vsel %vm565, %v822, 0.0
  %v824 = vrot.slane %v823, 4
  %v825 = vadd.f32 %v823, %v824
  %v826 = vrot.slane %v825, 2
  %v827 = vadd.f32 %v825, %v826
  %v828 = vrot.slane %v827, 1
  %v829 = vadd.f32 %v827, %v828
  %v830 = vmul.f32 %v528, %v829
  %v831 = vmul.f32 %v830, %v731
  %832 = vst [vmem:[#allocation2] sm:$0x80] %v831
  %v833 = vld [vmem:[#allocation2 + $0x4] sm:$0xf]
  %v834 = vsel %vm565, %v833, 0.0
  %v835 = vrot.slane %v834, 4
  %v836 = vadd.f32 %v834, %v835
  %v837 = vrot.slane %v836, 2
  %v838 = vadd.f32 %v836, %v837
  %v839 = vrot.slane %v838, 1
  %v840 = vadd.f32 %v838, %v839
  %v841 = vmul.f32 %v840, %v674
  %v842 = vsub.f32 %v833, %v841
  %v843 = vmul.f32 %v842, %v842
  %v844 = vsel %vm565, %v843, 0.0
  %v845 = vrot.slane %v844, 4
  %v846 = vadd.f32 %v844, %v845
  %v847 = vrot.slane %v846, 2
  %v848 = vadd.f32 %v846, %v847
  %v849 = vrot.slane %v848, 1
  %v850 = vadd.f32 %v848, %v849
  %v851 = vmul.f32 %v850, %v674
  %v852 = vadd.f32 %v851, 1e-05
  %v853 = vrsqrt.pop %v852
  %v854 = vmul.f32 %v842, %v853
  %v855 = vrot.slane %v692, 4
  %v857 = vmul.f32 %v854, %v855
  %v858 = vrot.slane %v698, 4
  %v860 = vadd.f32 %v857, %v858
  %v862 = vrot.slane %v453, 4
  %v864 = vadd.f32 %v860, %v862
  %865 = vst [vmem:[#allocation2 + $0x4] sm:$0xf] %v864
  %v866 = vld [vmem:[#allocation2] sm:$0xff]
  %v867 = vxor.u32 %v235, 2147483648
  %v868 = vmul.f32 %v867, 1.442695
  %v869 = vpow.pop %v868
  %v870 = vadd.f32 %v869, 1.0
  %v871 = vrcp.pop %v870
  %v872 = vmul.f32 1.0, %v871
  %v873 = vmul.f32 %v235, %v872
  %v874 = vmul.f32 %v866, %v873
  %v875 = vld [vmem:[%s14] sm:$0xf]
  %v876 = vld [vmem:[%s14 + $0x4] sm:$0xf]
  %v877 = vpack.c.bf16 %v874, %v874
  %v878 = vld [vmem:[%s15] sm:$0xff]
  %v879 = vld [vmem:[%s15 + $0x8] sm:$0xff]
  %881 = vset.pattern.permute.xlu0 0
  %882 = vperm.xlu0 %881, %v878
  %v883 = vpop.permute.xlu0 %882
  %886 = vset.pattern.permute.xlu0 0
  %887 = vperm.xlu0 %886, %v879
  %v888 = vpop.permute.xlu0 %887
  %v892 = vunpack.c.l.b16 %v875
  %v893 = vunpack.c.l.b16 %v876
  %v894 = vpack.c.b16 %v893, %v892
  %vm895 = vcmask 64512
  %v897 = vsel %vm895, %v894, 0
  %v900 = vsel %vm565, %v877, 0
  %902 = vmatprep.subr.bf16.mxu0 0
  %903 = vmatpush1.bf16.msra.mxu0 %v900
  %904 = vmatprep.subr.bf16.mxu0 0
  %905 = vmatpush1.bf16.msra.mxu0 0
  %906 = vmatprep.subr.bf16.mxu0 0
  %907 = vmatpush1.bf16.msra.mxu0 0
  %908 = vmatprep.subr.bf16.mxu0 0
  %909 = vmatpush1.bf16.msra.mxu0 0
  %910 = vmatprep.subr.bf16.mxu0 0
  %911 = vmatpush1.bf16.msra.mxu0 0
  %912 = vmatprep.subr.bf16.mxu0 0
  %913 = vmatpush1.bf16.msra.mxu0 0
  %914 = vmatprep.subr.bf16.mxu0 0
  %915 = vmatpush1.bf16.msra.mxu0 0
  %916 = vmatprep.subr.bf16.mxu0 0
  %917 = vmatpush1.bf16.msra.mxu0 0
  %918 = vmatprep.subr.bf16.mxu0 0
  %919 = vmatpush1.bf16.msra.mxu0 0
  %920 = vmatprep.subr.bf16.mxu0 0
  %921 = vmatpush1.bf16.msra.mxu0 0
  %922 = vmatprep.subr.bf16.mxu0 0
  %923 = vmatpush1.bf16.msra.mxu0 0
  %924 = vmatprep.subr.bf16.mxu0 0
  %925 = vmatpush1.bf16.msra.mxu0 0
  %926 = vmatprep.subr.bf16.mxu0 0
  %927 = vmatpush1.bf16.msra.mxu0 0
  %928 = vmatprep.subr.bf16.mxu0 0
  %929 = vmatpush1.bf16.msra.mxu0 0
  %930 = vmatprep.subr.bf16.mxu0 0
  %931 = vmatpush1.bf16.msra.mxu0 0
  %932 = vmatprep.subr.bf16.mxu0 0
  %933 = vmatpush1.bf16.msra.mxu0 0
  %934 = vmatprep.mubr.bf16.mxu0 0
  %935 = vmatmul.mubr.bf16.gmra.mrb[0].mxu0 %v897
  %v936 = vpop.f32.mrb[0].mxu0
  %v937 = vadd.f32 %v883, %v936
  %v938 = vpop.f32.mrb[0].mxu0
  %v939 = vpop.f32.mrb[0].mxu0
  %v940 = vadd.f32 %v888, %v939
  %v941 = vpop.f32.mrb[0].mxu0
  %942 = vdwg.mxu0
  %v943 = vadd.f32 %v937, %v123
  %v944 = vadd.f32 %v940, %v124
  %v945 = vld [vmem:[%s16] sm:$0xf]
  %v946 = vld [vmem:[%s16 + $0x4] sm:$0xf]
  %v947 = vld [vmem:[%s16 + $0x8] sm:$0xf]
  %v948 = vld [vmem:[%s16 + $0xc] sm:$0xf]
  %v949 = vpack.c.bf16 %v944, %v943
  %v950 = vld [vmem:[%s17] sm:$0xff]
  %v951 = vld [vmem:[%s17 + $0x8] sm:$0xff]
  %v952 = vld [vmem:[%s17 + $0x10] sm:$0xff]
  %v953 = vld [vmem:[%s17 + $0x18] sm:$0xff]
  %955 = vset.pattern.permute.xlu0 0
  %956 = vperm.xlu0 %955, %v950
  %v957 = vpop.permute.xlu0 %956
  %960 = vset.pattern.permute.xlu0 0
  %961 = vperm.xlu0 %960, %v951
  %v962 = vpop.permute.xlu0 %961
  %965 = vset.pattern.permute.xlu0 0
  %966 = vperm.xlu0 %965, %v952
  %v967 = vpop.permute.xlu0 %966
  %970 = vset.pattern.permute.xlu0 0
  %971 = vperm.xlu0 %970, %v953
  %v972 = vpop.permute.xlu0 %971
  %v978 = vunpack.c.l.b16 %v945
  %v979 = vunpack.c.l.b16 %v946
  %v980 = vunpack.c.l.b16 %v947
  %v981 = vunpack.c.l.b16 %v948
  %v982 = vpack.c.b16 %v979, %v978
  %v983 = vpack.c.b16 %v981, %v980
  %v985 = vsel %vm174, %v982, 0
  %v988 = vsel %vm174, %v983, 0
  %990 = vmatprep.subr.bf16.mxu0 0
  %991 = vmatpush1.bf16.msra.mxu0 %v949
  %992 = vmatprep.subr.bf16.mxu0 0
  %993 = vmatpush1.bf16.msra.mxu0 0
  %994 = vmatprep.subr.bf16.mxu0 0
  %995 = vmatpush1.bf16.msra.mxu0 0
  %996 = vmatprep.subr.bf16.mxu0 0
  %997 = vmatpush1.bf16.msra.mxu0 0
  %998 = vmatprep.subr.bf16.mxu0 0
  %999 = vmatpush1.bf16.msra.mxu0 0
  %1000 = vmatprep.subr.bf16.mxu0 0
  %1001 = vmatpush1.bf16.msra.mxu0 0
  %1002 = vmatprep.subr.bf16.mxu0 0
  %1003 = vmatpush1.bf16.msra.mxu0 0
  %1004 = vmatprep.subr.bf16.mxu0 0
  %1005 = vmatpush1.bf16.msra.mxu0 0
  %1006 = vmatprep.subr.bf16.mxu0 0
  %1007 = vmatpush1.bf16.msra.mxu0 0
  %1008 = vmatprep.subr.bf16.mxu0 0
  %1009 = vmatpush1.bf16.msra.mxu0 0
  %1010 = vmatprep.subr.bf16.mxu0 0
  %1011 = vmatpush1.bf16.msra.mxu0 0
  %1012 = vmatprep.subr.bf16.mxu0 0
  %1013 = vmatpush1.bf16.msra.mxu0 0
  %1014 = vmatprep.subr.bf16.mxu0 0
  %1015 = vmatpush1.bf16.msra.mxu0 0
  %1016 = vmatprep.subr.bf16.mxu0 0
  %1017 = vmatpush1.bf16.msra.mxu0 0
  %1018 = vmatprep.subr.bf16.mxu0 0
  %1019 = vmatpush1.bf16.msra.mxu0 0
  %1020 = vmatprep.subr.bf16.mxu0 0
  %1021 = vmatpush1.bf16.msra.mxu0 0
  %1022 = vmatprep.mubr.bf16.mxu0 0
  %1023 = vmatmul.mubr.bf16.gmra.mrb[0].mxu0 %v985
  %v1024 = vpop.f32.mrb[0].mxu0
  %v1025 = vadd.f32 %v957, %v1024
  %v1026 = vpop.f32.mrb[0].mxu0
  %v1027 = vpop.f32.mrb[0].mxu0
  %v1028 = vadd.f32 %v962, %v1027
  %v1029 = vpop.f32.mrb[0].mxu0
  %1030 = vmatprep.mubr.bf16.mxu0 0
  %1031 = vmatmul.mubr.bf16.gmra.mrb[0].mxu0 %v988
  %v1032 = vpop.f32.mrb[0].mxu0
  %v1033 = vadd.f32 %v967, %v1032
  %v1034 = vpop.f32.mrb[0].mxu0
  %v1035 = vpop.f32.mrb[0].mxu0
  %v1036 = vadd.f32 %v972, %v1035
  %v1037 = vpop.f32.mrb[0].mxu0
  %1038 = vdwg.mxu0
  %1039 = vst [vmem:[%s20] sm:$0xff] %v1025
  %1040 = vst [vmem:[%s20 + $0x8] sm:$0xff] %v1028
  %1041 = vst [vmem:[%s20 + $0x10] sm:$0xff] %v1033
  %1042 = vst [vmem:[%s20 + $0x18] sm:$0xff] %v1036
  // Predicated region
  $region82: #{_tgn_mlstm_step.1} parent=0 // pred_check
    _
  $region83: #{_tgn_mlstm_step.1} parent=0 // pred_check_branch
    %1044 = sbr.rel (0) target = $region85
  $region84: #{_tgn_mlstm_step.1} parent=0 // pred_region
    _
  $region85: #{_tgn_mlstm_step.1} parent=0 // pred_fallthru
    _
  // Predicated region
  $region86: #{_tgn_mlstm_step.1} parent=0 // pred_check
    _
  $region87: #{_tgn_mlstm_step.1} parent=0 // pred_check_branch
    %1046 = sbr.rel (0) target = $region89
  $region88: #{_tgn_mlstm_step.1} parent=0 // pred_region
    _
  $region89: #{_tgn_mlstm_step.1} parent=0 // pred_fallthru
    _
  // Predicated region
  $region90: #{_tgn_mlstm_step.1} parent=0 // pred_check
    _
  $region91: #{_tgn_mlstm_step.1} parent=0 // pred_check_branch
    %1048 = sbr.rel (0) target = $region93
  $region92: #{_tgn_mlstm_step.1} parent=0 // pred_region
    _
  $region93: #{_tgn_mlstm_step.1} parent=0 // pred_fallthru
    _
  // Predicated region
  $region94: #{_tgn_mlstm_step.1} parent=0 // pred_check
    _
  $region95: #{_tgn_mlstm_step.1} parent=0 // pred_check_branch
    %1050 = sbr.rel (0) target = $region97
  $region96: #{_tgn_mlstm_step.1} parent=0 // pred_region
    _
  $region97: #{_tgn_mlstm_step.1} parent=0 // pred_fallthru
    _
  // Predicated region
  $region98: #{_tgn_mlstm_step.1} parent=0 // pred_check
    _
  $region99: #{_tgn_mlstm_step.1} parent=0 // pred_check_branch
    %1052 = sbr.rel (0) target = $region101
  $region100: #{_tgn_mlstm_step.1} parent=0 // pred_region
    _
  $region101: #{_tgn_mlstm_step.1} parent=0 // pred_fallthru
    _
  // Predicated region
  $region102: #{_tgn_mlstm_step.1} parent=0 // pred_check
    _
  $region103: #{_tgn_mlstm_step.1} parent=0 // pred_check_branch
    %1054 = sbr.rel (0) target = $region105
  $region104: #{_tgn_mlstm_step.1} parent=0 // pred_region
    _
  $region105: #{_tgn_mlstm_step.1} parent=0 // pred_fallthru
    _
  // Predicated region
  $region106: #{_tgn_mlstm_step.1} parent=0 // pred_check
    _
  $region107: #{_tgn_mlstm_step.1} parent=0 // pred_check_branch
    %1056 = sbr.rel (0) target = $region109
  $region108: #{_tgn_mlstm_step.1} parent=0 // pred_region
    _
  $region109: #{_tgn_mlstm_step.1} parent=0 // pred_fallthru
    _
  // Predicated region
  $region110: #{_tgn_mlstm_step.1} parent=0 // pred_check
    _
  $region111: #{_tgn_mlstm_step.1} parent=0 // pred_check_branch
    %1058 = sbr.rel (0) target = $region113
  $region112: #{_tgn_mlstm_step.1} parent=0 // pred_region
    _
  $region113: #{_tgn_mlstm_step.1} parent=0 // pred_fallthru
    _

</llo_original>
